<compile_context>
chip_gen: v7x
topology: tpu7x:2x2x1
jax: 0.10.0
libtpu: 0.0.40
codegen_flags: <defaults>
</compile_context>

<pallas_src>
import jax
import jax.numpy as jnp
import numpy as np
from jax.experimental import pallas as pl
from jax.experimental.pallas import tpu as pltpu


# ----------------------------- fused kernel ---------------------------------
def _csm_kernel(y_ref, a2_ref, fsr_ref, fsi_ref, m_ref, g_ref, bias_ref,
                o_ref, acc_ref):
    # y_ref   : (1, nt_blk, R, 2*NcNx) bf16  time tile of G row-stacked slabs
    # a2_ref  : (2*NcNx, 2*NxC) bf16  x-iDFT + ACS-x mask + 1/Nt + layout map
    # fsr_ref : (3*R, R) bf16  per-tap (row-shift o Re y-iDFT o ACS-y), blockdiag
    # fsi_ref : (3*R, R) bf16  same for the Im part
    # m_ref   : (3, NxC, NxC) bf16  per-tap x-shift + channel mix (+I in tap 1)
    # g_ref   : (NxC, NxC) bf16  block-diag ones (per-pixel coil sum-of-squares)
    # bias_ref: (1, NxC) f32
    # o_ref   : (1, R, NxC) f32
    # acc_ref : (R, 2*NcNx) f32  time-sum scratch
    t_idx = pl.program_id(1)

    @pl.when(t_idx == 0)
    def _init():
        acc_ref[...] = jnp.zeros_like(acc_ref)

    # bf16 stream, f32 accumulation (padded tail frames are zero).
    acc_ref[...] += jnp.sum(y_ref[0].astype(jnp.float32), axis=0)

    @pl.when(t_idx == pl.num_programs(1) - 1)
    def _finish():
        rows = o_ref.shape[1]          # R = G*Ny
        nxc = o_ref.shape[2]           # Nx * 2*Nc

        acc = acc_ref[...].astype(jnp.bfloat16)
        # masked time-mean + ortho inverse x-DFT, landing in channels-last
        # conv layout; re/im halves side by side on lanes.
        uv = jnp.dot(acc, a2_ref[...], preferred_element_type=jnp.float32)
        u = uv[:, :nxc].astype(jnp.bfloat16)
        v = uv[:, nxc:].astype(jnp.bfloat16)

        # inverse y-DFT with the three conv row-shifts folded in (taps stacked
        # on rows -> M = 3*R, zero padding at slab borders via block-diagonals)
        x = (jnp.dot(fsr_ref[...], u, preferred_element_type=jnp.float32) +
             jnp.dot(fsi_ref[...], v, preferred_element_type=jnp.float32))

        # residual 3x3 conv: three channels-last matmuls (identity in tap 1).
        csm = bias_ref[...]
        for dy in range(3):
            xd = x[dy * rows:(dy + 1) * rows].astype(jnp.bfloat16)
            csm = csm + jnp.dot(xd, m_ref[dy],
                                preferred_element_type=jnp.float32)

        # RSS normalize over coils (block-diag ones matmul broadcasts the
        # per-pixel sum of squares back to every channel lane).
        sumsq = jnp.dot((csm * csm).astype(jnp.bfloat16), g_ref[...],
                        preferred_element_type=jnp.float32)
        norm = jnp.where(sumsq > 0.0, jax.lax.rsqrt(sumsq), 0.0)
        o_ref[...] = (csm * norm)[None]


# ----------------------------- constant builders -----------------------------
def _build_constants(Nc, Ny, Nx, Nt, G, w, b, n_center_lines,
                     limit_acs_fullysampled=True):
    C = 2 * Nc
    NxC = Nx * C
    NcNx = Nc * Nx
    R = G * Ny

    keep_y = np.ones((Ny,), np.float64)
    keep_y[n_center_lines // 2:-n_center_lines // 2] = 0.0
    keep_x = np.ones((Nx,), np.float64)
    if limit_acs_fullysampled:
        keep_x[n_center_lines:-n_center_lines] = 0.0

    # --- y-iDFT (ortho) with ACS-y mask, 3 conv row-shift taps folded in -----
    yi = np.arange(Ny)
    Fy = np.exp(2j * np.pi * np.outer(yi, yi) / Ny) / np.sqrt(Ny)   # F[y, ky]
    Fre = np.real(Fy) * keep_y[None, :]
    Fim = np.imag(Fy) * keep_y[None, :]
    Sy = np.zeros((3, Ny, Ny))
    for dy in range(3):
        for yy in range(Ny):
            ys = yy + dy - 1
            if 0 <= ys < Ny:
                Sy[dy, yy, ys] = 1.0
    fs_re = np.concatenate(
        [np.kron(np.eye(G), Sy[dy] @ Fre) for dy in range(3)], axis=0)
    fs_im = np.concatenate(
        [np.kron(np.eye(G), Sy[dy] @ Fim) for dy in range(3)], axis=0)
    assert fs_re.shape == (3 * R, R)

    # --- x-iDFT (ortho) + ACS-x mask + 1/Nt + (coil,re/im)->channels-last ----
    xi = np.arange(Nx)
    Wc = (np.exp(2j * np.pi * np.outer(xi, xi) / Nx) / np.sqrt(Nx) / Nt)
    Wc = Wc * keep_x[None, :]                                       # W[x, kx]
    Wre, Wim = np.real(Wc), np.imag(Wc)
    a2 = np.zeros((2 * NcNx, 2 * NxC))
    for c in range(Nc):
        r_re = slice(c * Nx, (c + 1) * Nx)                # acc re lanes, coil c
        r_im = slice(NcNx + c * Nx, NcNx + (c + 1) * Nx)  # acc im lanes, coil c
        col_re = np.arange(Nx) * C + 2 * c                # conv-layout re lanes
        col_im = col_re + 1                               # conv-layout im lanes
        # P block (combines with Re of y-DFT)
        a2[r_re, col_re] = Wre.T
        a2[r_re, col_im] = Wim.T
        a2[r_im, col_re] = -Wim.T
        a2[r_im, col_im] = Wre.T
        # Q block (combines with Im of y-DFT)
        a2[r_re, NxC + col_re] = -Wim.T
        a2[r_re, NxC + col_im] = Wre.T
        a2[r_im, NxC + col_re] = -Wre.T
        a2[r_im, NxC + col_im] = -Wim.T

    # --- 3x3 conv, channels-last: csm = sum_dy (shift_dy x0) @ M[dy] + bias ---
    w_np = np.asarray(w, np.float64)                      # (C, C, 3, 3) OIHW
    m = np.zeros((3, NxC, NxC))
    for dy in range(3):
        for dx in range(3):
            tap = w_np[:, :, dy, dx].T                    # (ci, co)
            for x in range(Nx):
                xs = x + dx - 1
                if 0 <= xs < Nx:
                    m[dy, xs * C:(xs + 1) * C, x * C:(x + 1) * C] += tap
    m[1] += np.eye(NxC)                                   # residual identity

    g = np.kron(np.eye(Nx), np.ones((C, C)))
    bias_row = np.tile(np.asarray(b, np.float64), Nx).reshape(1, NxC)

    bf = jnp.bfloat16
    return (jnp.asarray(a2, bf), jnp.asarray(fs_re, bf), jnp.asarray(fs_im, bf),
            jnp.asarray(m, bf), jnp.asarray(g, bf),
            jnp.asarray(bias_row, jnp.float32))


def _pick_group(BZ, Ny, target_rows=128):
    """# of (b,z) slabs stacked per grid step (keeps >=2 parallel steps)."""
    cap = max(1, target_rows // max(Ny, 1))
    if BZ >= 2:
        cap = min(cap, BZ // 2)            # v7x: leave >= 2 steps for 2 TCs
    cap = max(1, min(cap, BZ))
    for g in range(cap, 0, -1):            # largest divisor -> no batch padding
        if BZ % g == 0:
            return g
    return 1


# ----------------------------- wrapper ---------------------------------------
def csm_sriram_forward(y, w, b, n_center_lines=24, limit_acs_fullysampled=True,
                       time_block=None):
    """y: complex64 (Nb, Nc, Nz, Nt, Ny, Nx); w: (2Nc, 2Nc, 3, 3) OIHW; b: (2Nc,)."""
    Nb, Nc, Nz, Nt, Ny, Nx = y.shape
    C = 2 * Nc
    NxC = Nx * C
    NcNx = Nc * Nx
    L_in = 2 * NcNx
    BZ = Nb * Nz

    G = _pick_group(BZ, Ny)
    n_groups = BZ // G
    R = G * Ny

    a2, fs_re, fs_im, m_c, g_m, bias_row = _build_constants(
        Nc, Ny, Nx, Nt, G, w, b, n_center_lines, limit_acs_fullysampled)

    # 'b c z t y x -> group, t, (g y), (r c x)' in bf16 (lane-dense stream).
    def pack(part):
        p = jnp.transpose(part.astype(jnp.bfloat16), (0, 2, 3, 4, 1, 5))
        return p.reshape(BZ, Nt, Ny, NcNx)
    y_pack = jnp.concatenate([pack(jnp.real(y)), pack(jnp.imag(y))], axis=-1)
    y_pack = (y_pack.reshape(n_groups, G, Nt, Ny, L_in)
              .transpose(0, 2, 1, 3, 4).reshape(n_groups, Nt, R, L_in))

    # time tile from a VMEM byte budget; zero-pad the tail (exact: 1/Nt folded
    # with the true Nt, padded frames contribute zero to the sum).
    if time_block is None:
        budget = 4 * 1024 * 1024
        time_block = max(1, budget // (R * L_in * (2 + 4)))
    nt_blk = int(max(1, min(int(time_block), Nt)))
    n_t = -(-Nt // nt_blk)
    Nt_pad = n_t * nt_blk
    if Nt_pad > Nt:
        y_pack = jnp.pad(y_pack, ((0, 0), (0, Nt_pad - Nt), (0, 0), (0, 0)))

    # vmem limit from actual need (double-buffered blocks + temps), <= 48 MiB.
    const_bytes = 2 * int(a2.size + fs_re.size + fs_im.size + m_c.size
                          + g_m.size) + 4 * int(bias_row.size)
    est = (2 * nt_blk * R * L_in * 2        # streamed y, double-buffered bf16
           + nt_blk * R * L_in * 4          # f32 upcast temp in the reduction
           + 2 * const_bytes                # constants (double-buffered)
           + 2 * R * NxC * 4                # output block
           + R * L_in * 4                   # accumulator scratch
           + 6 * R * NxC * 4                # epilogue temporaries
           + 2 * 1024 * 1024)               # headroom
    vmem_limit = int(min(48 * 2 ** 20, max(8 * 2 ** 20, est)))

    call = pl.pallas_call(
        _csm_kernel,
        out_shape=jax.ShapeDtypeStruct((n_groups, R, NxC), jnp.float32),
        grid_spec=pltpu.PrefetchScalarGridSpec(
            num_scalar_prefetch=0,
            grid=(n_groups, n_t),
            in_specs=[
                pl.BlockSpec((1, nt_blk, R, L_in), lambda i, k: (i, k, 0, 0)),
                pl.BlockSpec((2 * NcNx, 2 * NxC), lambda i, k: (0, 0)),
                pl.BlockSpec((3 * R, R), lambda i, k: (0, 0)),
                pl.BlockSpec((3 * R, R), lambda i, k: (0, 0)),
                pl.BlockSpec((3, NxC, NxC), lambda i, k: (0, 0, 0)),
                pl.BlockSpec((NxC, NxC), lambda i, k: (0, 0)),
                pl.BlockSpec((1, NxC), lambda i, k: (0, 0)),
            ],
            out_specs=pl.BlockSpec((1, R, NxC), lambda i, k: (i, 0, 0)),
            scratch_shapes=[pltpu.VMEM((R, L_in), jnp.float32)],
        ),
        compiler_params=pltpu.CompilerParams(
            dimension_semantics=("parallel", "arbitrary"),
            vmem_limit_bytes=vmem_limit),
    )
    out = call(y_pack, a2, fs_re, fs_im, m_c, g_m, bias_row)

    # '(group, (g y), (x c r)) -> b c z y x' complex
    csm_ri = out.reshape(Nb, Nz, Ny, Nx, Nc, 2)
    csm_ri = jnp.transpose(csm_ri, (0, 4, 1, 2, 3, 5))
    return csm_ri[..., 0] + 1j * csm_ri[..., 1]


# ----------------------------- plain-JAX reference --------------------------
def _center_mask(Ny, Nx, n_center_lines, limit_acs_fullysampled=True):
    mask = np.ones((Ny, Nx), np.float32)
    mask[n_center_lines // 2:-n_center_lines // 2, :] = 0.0
    if limit_acs_fullysampled:
        mask[:, n_center_lines:-n_center_lines] = 0.0
    return jnp.asarray(mask)


def reference_forward(y, w, b, n_center_lines=24):
    Nb, Nc, Nz, Nt, Ny, Nx = y.shape
    ym = jnp.mean(y, axis=3)
    ym = ym * _center_mask(Ny, Nx, n_center_lines).astype(ym.dtype)
    x0 = jnp.fft.ifftn(ym, axes=(-2, -1), norm='ortho')
    # CSM_refine: view_as_real + 'b c z y x r -> (b z) (c r) y x'
    xr = jnp.stack([jnp.real(x0), jnp.imag(x0)], -1)
    xr = jnp.transpose(xr, (0, 2, 1, 5, 3, 4)).reshape(Nb * Nz, Nc * 2, Ny, Nx)
    xr = xr.astype(jnp.float32)
    conv = jax.lax.conv_general_dilated(
        xr, w.astype(jnp.float32), (1, 1), 'SAME',
        dimension_numbers=('NCHW', 'OIHW', 'NCHW')) + b[None, :, None, None]
    csm = xr + conv
    csm = csm.reshape(Nb, Nz, Nc, 2, Ny, Nx)
    csm = jnp.transpose(csm, (0, 2, 1, 4, 5, 3))
    csm = csm[..., 0] + 1j * csm[..., 1]
    rss = jnp.sqrt(jnp.sum(jnp.abs(csm) ** 2, axis=1, keepdims=True))
    nf = jnp.where(rss > 0, 1.0 / rss, 0.0)
    return nf * csm


# ----------------------------- main ------------------------------------------
if __name__ == "__main__":
    # BZ = 8 -> G = 4 slabs per step (M = 64), 2 parallel grid steps;
    # Nt = 6 with time_block = 4 exercises multi-step reduction + padded tail.
    Nb, Nc, Nz, Nt, Ny, Nx = 2, 4, 4, 6, 16, 16
    C = 2 * Nc
    key = jax.random.PRNGKey(0)
    k1, k2, k3, k4 = jax.random.split(key, 4)
    y = (jax.random.normal(k1, (Nb, Nc, Nz, Nt, Ny, Nx), jnp.float32)
         + 1j * jax.random.normal(k2, (Nb, Nc, Nz, Nt, Ny, Nx), jnp.float32)
         ).astype(jnp.complex64)
    # deterministic synthetic net_csm = Conv2d(2*Nc, 2*Nc, 3, padding=1)
    w = 0.1 * jax.random.normal(k3, (C, C, 3, 3), jnp.float32)   # OIHW
    b = 0.1 * jax.random.normal(k4, (C,), jnp.float32)

    csm = csm_sriram_forward(y, w, b, n_center_lines=4, time_block=4)
    csm = jax.block_until_ready(csm)

    ref = reference_forward(y, w, b, n_center_lines=4)
    np.testing.assert_allclose(np.asarray(csm), np.asarray(ref),
                               rtol=5e-2, atol=2e-2)
    print("KERNEL_OK")
</pallas_src>

<mosaic_0001>
module attributes {stable_mosaic.version = 11 : i64} {
  func.func @_csm_kernel(%arg0: i32, %arg1: i32, %arg2: memref<1x4x64x128xbf16, #tpu.memory_space<vmem>>, %arg3: memref<128x256xbf16, #tpu.memory_space<vmem>>, %arg4: memref<192x64xbf16, #tpu.memory_space<vmem>>, %arg5: memref<192x64xbf16, #tpu.memory_space<vmem>>, %arg6: memref<3x128x128xbf16, #tpu.memory_space<vmem>>, %arg7: memref<128x128xbf16, #tpu.memory_space<vmem>>, %arg8: memref<1x128xf32, #tpu.memory_space<vmem>>, %arg9: memref<1x64x128xf32, #tpu.memory_space<vmem>>, %arg10: memref<64x128xf32, #tpu.memory_space<vmem>>) attributes {dimension_semantics = [#tpu.dimension_semantics<parallel>, #tpu.dimension_semantics<arbitrary>], iteration_bounds = array<i64: 2, 2>, scalar_prefetch = 0 : i64, scratch_operands = 1 : i64, tpu.core_type = #tpu.core_type<tc>, window_params = [{transform_indices = @transform_0, window_bounds = array<i64: 1, 4, 64, 128>}, {pipeline_mode = #tpu.pipeline_mode<synchronous>, transform_indices = @transform_1, window_bounds = array<i64: 128, 256>}, {pipeline_mode = #tpu.pipeline_mode<synchronous>, transform_indices = @transform_2, window_bounds = array<i64: 192, 64>}, {pipeline_mode = #tpu.pipeline_mode<synchronous>, transform_indices = @transform_3, window_bounds = array<i64: 192, 64>}, {pipeline_mode = #tpu.pipeline_mode<synchronous>, transform_indices = @transform_4, window_bounds = array<i64: 3, 128, 128>}, {pipeline_mode = #tpu.pipeline_mode<synchronous>, transform_indices = @transform_5, window_bounds = array<i64: 128, 128>}, {pipeline_mode = #tpu.pipeline_mode<synchronous>, transform_indices = @transform_6, window_bounds = array<i64: 1, 128>}, {transform_indices = @transform_7, window_bounds = array<i64: 1, 64, 128>}]} {
    %c0_i32 = arith.constant 0 : i32
    %0 = arith.cmpi eq, %arg1, %c0_i32 : i32
    %1 = arith.extui %0 : i1 to i32
    %c0_i32_0 = arith.constant 0 : i32
    %2 = arith.cmpi ne, %1, %c0_i32_0 : i32
    scf.if %2 {
      %cst_9 = arith.constant 0.000000e+00 : f32
      %13 = vector.broadcast %cst_9 : f32 to vector<64x128xf32>
      %c0_10 = arith.constant 0 : index
      %c0_11 = arith.constant 0 : index
      %14 = vector.load %arg10[%c0_10, %c0_11] : memref<64x128xf32, #tpu.memory_space<vmem>>, vector<64x128xf32>
      tpu.vector_store %arg10[%c0_10, %c0_11], %13 {strides = array<i32>} : memref<64x128xf32, #tpu.memory_space<vmem>>, vector<64x128xf32>,
    } else {
    }
    %c0 = arith.constant 0 : index
    %c0_1 = arith.constant 0 : index
    %3 = vector.load %arg10[%c0, %c0_1] : memref<64x128xf32, #tpu.memory_space<vmem>>, vector<64x128xf32>
    %c0_2 = arith.constant 0 : index
    %c0_3 = arith.constant 0 : index
    %c0_4 = arith.constant 0 : index
    %c0_5 = arith.constant 0 : index
    %4 = vector.load %arg2[%c0_2, %c0_3, %c0_4, %c0_5] : memref<1x4x64x128xbf16, #tpu.memory_space<vmem>>, vector<1x4x64x128xbf16>
    %5 = vector.shape_cast %4 : vector<1x4x64x128xbf16> to vector<4x64x128xbf16>
    %6 = arith.extf %5 : vector<4x64x128xbf16> to vector<4x64x128xf32>
    %cst = arith.constant dense<0.000000e+00> : vector<64x128xf32>
    %7 = vector.multi_reduction <add>, %6, %cst [0] : vector<4x64x128xf32> to vector<64x128xf32>
    %8 = arith.addf %3, %7 : vector<64x128xf32>
    %c0_6 = arith.constant 0 : index
    %c0_7 = arith.constant 0 : index
    %9 = vector.load %arg10[%c0_6, %c0_7] : memref<64x128xf32, #tpu.memory_space<vmem>>, vector<64x128xf32>
    tpu.vector_store %arg10[%c0_6, %c0_7], %8 {strides = array<i32>} : memref<64x128xf32, #tpu.memory_space<vmem>>, vector<64x128xf32>,
    %c1_i32 = arith.constant 1 : i32
    %10 = arith.cmpi eq, %arg1, %c1_i32 : i32
    %11 = arith.extui %10 : i1 to i32
    %c0_i32_8 = arith.constant 0 : i32
    %12 = arith.cmpi ne, %11, %c0_i32_8 : i32
    scf.if %12 {
      %c0_9 = arith.constant 0 : index
      %c0_10 = arith.constant 0 : index
      %13 = vector.load %arg10[%c0_9, %c0_10] : memref<64x128xf32, #tpu.memory_space<vmem>>, vector<64x128xf32>
      %14 = arith.truncf %13 : vector<64x128xf32> to vector<64x128xbf16>
      %c0_11 = arith.constant 0 : index
      %c0_12 = arith.constant 0 : index
      %15 = vector.load %arg3[%c0_11, %c0_12] : memref<128x256xbf16, #tpu.memory_space<vmem>>, vector<128x256xbf16>
      %cst_13 = arith.constant dense<0.000000e+00> : vector<64x256xf32>
      %16 = tpu.matmul %14, %15, %cst_13 {dimension_numbers = #tpu.dot_dimension_numbers<[1], [0], [0], [1], [0, 0, 1, 1], [], []>} : vector<64x128xbf16>, vector<128x256xbf16>, vector<64x256xf32> -> vector<64x256xf32>
      %17 = vector.extract_strided_slice %16 {offsets = [0, 0], sizes = [64, 128], strides = [1, 1]} : vector<64x256xf32> to vector<64x128xf32>
      %18 = arith.truncf %17 : vector<64x128xf32> to vector<64x128xbf16>
      %19 = vector.extract_strided_slice %16 {offsets = [0, 128], sizes = [64, 128], strides = [1, 1]} : vector<64x256xf32> to vector<64x128xf32>
      %20 = arith.truncf %19 : vector<64x128xf32> to vector<64x128xbf16>
      %c0_14 = arith.constant 0 : index
      %c0_15 = arith.constant 0 : index
      %21 = vector.load %arg4[%c0_14, %c0_15] : memref<192x64xbf16, #tpu.memory_space<vmem>>, vector<192x64xbf16>
      %cst_16 = arith.constant dense<0.000000e+00> : vector<192x128xf32>
      %22 = tpu.matmul %21, %18, %cst_16 {dimension_numbers = #tpu.dot_dimension_numbers<[1], [0], [0], [1], [0, 0, 1, 1], [], []>} : vector<192x64xbf16>, vector<64x128xbf16>, vector<192x128xf32> -> vector<192x128xf32>
      %c0_17 = arith.constant 0 : index
      %c0_18 = arith.constant 0 : index
      %23 = vector.load %arg5[%c0_17, %c0_18] : memref<192x64xbf16, #tpu.memory_space<vmem>>, vector<192x64xbf16>
      %cst_19 = arith.constant dense<0.000000e+00> : vector<192x128xf32>
      %24 = tpu.matmul %23, %20, %cst_19 {dimension_numbers = #tpu.dot_dimension_numbers<[1], [0], [0], [1], [0, 0, 1, 1], [], []>} : vector<192x64xbf16>, vector<64x128xbf16>, vector<192x128xf32> -> vector<192x128xf32>
      %25 = arith.addf %22, %24 : vector<192x128xf32>
      %c0_20 = arith.constant 0 : index
      %c0_21 = arith.constant 0 : index
      %26 = vector.load %arg8[%c0_20, %c0_21] : memref<1x128xf32, #tpu.memory_space<vmem>>, vector<1x128xf32>
      %27 = vector.extract_strided_slice %25 {offsets = [0, 0], sizes = [64, 128], strides = [1, 1]} : vector<192x128xf32> to vector<64x128xf32>
      %28 = arith.truncf %27 : vector<64x128xf32> to vector<64x128xbf16>
      %c0_22 = arith.constant 0 : index
      %c0_23 = arith.constant 0 : index
      %c0_24 = arith.constant 0 : index
      %29 = vector.load %arg6[%c0_22, %c0_23, %c0_24] : memref<3x128x128xbf16, #tpu.memory_space<vmem>>, vector<1x128x128xbf16>
      %30 = vector.shape_cast %29 : vector<1x128x128xbf16> to vector<128x128xbf16>
      %cst_25 = arith.constant dense<0.000000e+00> : vector<64x128xf32>
      %31 = tpu.matmul %28, %30, %cst_25 {dimension_numbers = #tpu.dot_dimension_numbers<[1], [0], [0], [1], [0, 0, 1, 1], [], []>} : vector<64x128xbf16>, vector<128x128xbf16>, vector<64x128xf32> -> vector<64x128xf32>
      %32 = vector.broadcast %26 : vector<1x128xf32> to vector<64x128xf32>
      %33 = arith.addf %32, %31 : vector<64x128xf32>
      %34 = vector.extract_strided_slice %25 {offsets = [64, 0], sizes = [64, 128], strides = [1, 1]} : vector<192x128xf32> to vector<64x128xf32>
      %35 = arith.truncf %34 : vector<64x128xf32> to vector<64x128xbf16>
      %c1 = arith.constant 1 : index
      %c0_26 = arith.constant 0 : index
      %c0_27 = arith.constant 0 : index
      %36 = vector.load %arg6[%c1, %c0_26, %c0_27] : memref<3x128x128xbf16, #tpu.memory_space<vmem>>, vector<1x128x128xbf16>
      %37 = vector.shape_cast %36 : vector<1x128x128xbf16> to vector<128x128xbf16>
      %cst_28 = arith.constant dense<0.000000e+00> : vector<64x128xf32>
      %38 = tpu.matmul %35, %37, %cst_28 {dimension_numbers = #tpu.dot_dimension_numbers<[1], [0], [0], [1], [0, 0, 1, 1], [], []>} : vector<64x128xbf16>, vector<128x128xbf16>, vector<64x128xf32> -> vector<64x128xf32>
      %39 = arith.addf %33, %38 : vector<64x128xf32>
      %40 = vector.extract_strided_slice %25 {offsets = [128, 0], sizes = [64, 128], strides = [1, 1]} : vector<192x128xf32> to vector<64x128xf32>
      %41 = arith.truncf %40 : vector<64x128xf32> to vector<64x128xbf16>
      %c2 = arith.constant 2 : index
      %c0_29 = arith.constant 0 : index
      %c0_30 = arith.constant 0 : index
      %42 = vector.load %arg6[%c2, %c0_29, %c0_30] : memref<3x128x128xbf16, #tpu.memory_space<vmem>>, vector<1x128x128xbf16>
      %43 = vector.shape_cast %42 : vector<1x128x128xbf16> to vector<128x128xbf16>
      %cst_31 = arith.constant dense<0.000000e+00> : vector<64x128xf32>
      %44 = tpu.matmul %41, %43, %cst_31 {dimension_numbers = #tpu.dot_dimension_numbers<[1], [0], [0], [1], [0, 0, 1, 1], [], []>} : vector<64x128xbf16>, vector<128x128xbf16>, vector<64x128xf32> -> vector<64x128xf32>
      %45 = arith.addf %39, %44 : vector<64x128xf32>
      %46 = arith.mulf %45, %45 : vector<64x128xf32>
      %47 = arith.truncf %46 : vector<64x128xf32> to vector<64x128xbf16>
      %c0_32 = arith.constant 0 : index
      %c0_33 = arith.constant 0 : index
      %48 = vector.load %arg7[%c0_32, %c0_33] : memref<128x128xbf16, #tpu.memory_space<vmem>>, vector<128x128xbf16>
      %cst_34 = arith.constant dense<0.000000e+00> : vector<64x128xf32>
      %49 = tpu.matmul %47, %48, %cst_34 {dimension_numbers = #tpu.dot_dimension_numbers<[1], [0], [0], [1], [0, 0, 1, 1], [], []>} : vector<64x128xbf16>, vector<128x128xbf16>, vector<64x128xf32> -> vector<64x128xf32>
      %cst_35 = arith.constant 0.000000e+00 : f32
      %50 = vector.broadcast %cst_35 : f32 to vector<64x128xf32>
      %51 = arith.cmpf ogt, %49, %50 : vector<64x128xf32>
      %52 = math.rsqrt %49 : vector<64x128xf32>
      %cst_36 = arith.constant 0.000000e+00 : f32
      %53 = vector.broadcast %cst_36 : f32 to vector<64x128xf32>
      %54 = arith.select %51, %52, %53 : vector<64x128xi1>, vector<64x128xf32>
      %55 = arith.mulf %45, %54 : vector<64x128xf32>
      %56 = vector.shape_cast %55 : vector<64x128xf32> to vector<1x64x128xf32>
      %c0_37 = arith.constant 0 : index
      %c0_38 = arith.constant 0 : index
      %c0_39 = arith.constant 0 : index
      %57 = vector.load %arg9[%c0_37, %c0_38, %c0_39] : memref<1x64x128xf32, #tpu.memory_space<vmem>>, vector<1x64x128xf32>
      tpu.vector_store %arg9[%c0_37, %c0_38, %c0_39], %56 {strides = array<i32>} : memref<1x64x128xf32, #tpu.memory_space<vmem>>, vector<1x64x128xf32>,
    } else {
    }
    return
  }
  func.func @transform_0(%arg0: i32, %arg1: i32) -> (i32, i32, i32, i32) {
    %c0_i32 = arith.constant 0 : i32
    %c0_i32_0 = arith.constant 0 : i32
    %c0_i32_1 = arith.constant 0 : i32
    return %arg0, %arg1, %c0_i32, %c0_i32_0 : i32, i32, i32, i32
  }
  func.func @transform_1(%arg0: i32, %arg1: i32) -> (i32, i32) {
    %c0_i32 = arith.constant 0 : i32
    %c0_i32_0 = arith.constant 0 : i32
    %c0_i32_1 = arith.constant 0 : i32
    return %c0_i32, %c0_i32_0 : i32, i32
  }
  func.func @transform_2(%arg0: i32, %arg1: i32) -> (i32, i32) {
    %c0_i32 = arith.constant 0 : i32
    %c0_i32_0 = arith.constant 0 : i32
    %c0_i32_1 = arith.constant 0 : i32
    return %c0_i32, %c0_i32_0 : i32, i32
  }
  func.func @transform_3(%arg0: i32, %arg1: i32) -> (i32, i32) {
    %c0_i32 = arith.constant 0 : i32
    %c0_i32_0 = arith.constant 0 : i32
    %c0_i32_1 = arith.constant 0 : i32
    return %c0_i32, %c0_i32_0 : i32, i32
  }
  func.func @transform_4(%arg0: i32, %arg1: i32) -> (i32, i32, i32) {
    %c0_i32 = arith.constant 0 : i32
    %c0_i32_0 = arith.constant 0 : i32
    %c0_i32_1 = arith.constant 0 : i32
    %c0_i32_2 = arith.constant 0 : i32
    return %c0_i32, %c0_i32_0, %c0_i32_1 : i32, i32, i32
  }
  func.func @transform_5(%arg0: i32, %arg1: i32) -> (i32, i32) {
    %c0_i32 = arith.constant 0 : i32
    %c0_i32_0 = arith.constant 0 : i32
    %c0_i32_1 = arith.constant 0 : i32
    return %c0_i32, %c0_i32_0 : i32, i32
  }
  func.func @transform_6(%arg0: i32, %arg1: i32) -> (i32, i32) {
    %c0_i32 = arith.constant 0 : i32
    %c0_i32_0 = arith.constant 0 : i32
    %c0_i32_1 = arith.constant 0 : i32
    return %c0_i32, %c0_i32_0 : i32, i32
  }
  func.func @transform_7(%arg0: i32, %arg1: i32) -> (i32, i32, i32) {
    %c0_i32 = arith.constant 0 : i32
    %c0_i32_0 = arith.constant 0 : i32
    %c0_i32_1 = arith.constant 0 : i32
    return %arg0, %c0_i32, %c0_i32_0 : i32, i32, i32
  }
}

</mosaic_0001>

<llo_original>
// kernel: tpu_custom_call.1
$region0: #{tpu_custom_call.1}
  #allocation0 [shape = 'u32[]', space=smem, size = 0x4, offset = 0x4, fixed_abs, tag = 'smem constant byte address 0x4 - core index']
  #allocation1 [shape = 'u32[144,128]{1,0:T(1,128)}', space=vmem, size = 0x12000, scoped, tag = 'internal scratch']
  #allocation2 [shape = 'f32[64,128]{1,0:T(8,128)}', space=vmem, size = 0x8000, scoped, tag = 'scratch operand']
  %s0 = inlined_call_operand.hbm [shape: bf16[2,8,64,128], index: 0, kind: input, shape index: {}]
  %s1 = inlined_call_operand.vmem [shape: bf16[128,256], index: 1, kind: input, shape index: {}]
  %s2 = inlined_call_operand.vmem [shape: bf16[192,64], index: 2, kind: input, shape index: {}]
  %s3 = inlined_call_operand.vmem [shape: bf16[192,64], index: 3, kind: input, shape index: {}]
  %s4 = inlined_call_operand.vmem [shape: bf16[3,128,128], index: 4, kind: input, shape index: {}]
  %s5 = inlined_call_operand.hbm [shape: bf16[128,128], index: 5, kind: input, shape index: {}]
  %s6 = inlined_call_operand.vmem [shape: f32[1,128], index: 6, kind: input, shape index: {}]
  %s7 = inlined_call_operand.hbm [shape: f32[2,64,128], index: 7, kind: output, shape index: {}]
  %s8 = sld [smem:[#allocation0]]
  $region77: #{tpu_custom_call.1} parent=0
    _
  %s10 = ssub.s32 1, %s8
  %s11 = scalar_select 0, %s10, %s8
  $region1: #{tpu_custom_call.1} parent=0
    #allocation3 [shape = 'u8[131072]{0}', space=vmem, size = 0x20000, scoped, tag = 'input window, operand 0']
    #allocation4 [shape = 's32[2]{0}', space=sflag, size = 0x8, scoped, tag = 'scoped memory for tpu_custom_call.1']
    #allocation5 [shape = 's32[2]{0}', space=sflag, size = 0x8, scoped, tag = 'scoped memory for tpu_custom_call.1']
    #allocation6 [shape = 'u8[32768]{0}', space=vmem, size = 0x8000, scoped, tag = 'input window, operand 5, single buffered']
    #allocation7 [shape = 's32[1]{0}', space=sflag, size = 0x4, scoped, tag = 'scoped memory for tpu_custom_call.1']
    #allocation8 [shape = 'u8[65536]{0}', space=vmem, size = 0x10000, scoped, tag = 'output window, operand 0']
    %12 = vsyncpa [#allocation4], 0
    %s13 = scalar_lea.sflag [#allocation4], 1
    %14 = vsyncpa %s13, 0
    %15 = vsyncpa [#allocation7], 0
    %16 = vsyncpa [#allocation5], 0
    %s17 = scalar_lea.sflag [#allocation5], 1
    %18 = vsyncpa %s17, 0
    loop: start=0, step=1, limit=6
    $region2: #{tpu_custom_call.1} parent=1 // loop_pre_header
      _
    $region3: #{tpu_custom_call.1} parent=1 // loop_header
      %s20 = sphi 0, %s24
      %p21 = scmp.ge.s32.totalorder %s20, 6
      %s27 = sphi 0, %s39
      %s28 = sphi 0, %s35
      %s29 = sphi 0, %s27
      %s30 = sphi 0, %s28
      %s31 = sphi 0, %s29
      %s32 = sphi 0, %s30
      %s44 = sphi 0, %s46
      %s47 = sphi 0, %s44
      %s48 = sphi 0, %s47
      %s64 = sphi 0, %s48
      %s68 = sphi 0, %s68
      %s70 = sphi 0, %s68
      %s71 = sphi 0, %s70
      %s85 = sphi 0, %s71
      %s89 = sphi 0, %s89
      %s91 = sphi 0, %s89
      %s92 = sphi 0, %s91
      %s106 = sphi 0, %s92
      %s110 = sphi 0, %s110
      %s112 = sphi 0, %s110
      %s113 = sphi 0, %s112
      %s127 = sphi 0, %s113
      %s131 = sphi 0, %s131
      %s133 = sphi 0, %s131
      %s134 = sphi 0, %s133
      %s148 = sphi 0, %s134
      %s152 = sphi 0, %s152
      %s154 = sphi 0, %s152
      %s155 = sphi 0, %s154
      %s169 = sphi 0, %s155
      %s173 = sphi 0, %s173
      %s175 = sphi 0, %s173
      %s176 = sphi 0, %s175
      %s190 = sphi 0, %s176
      %s196 = sphi 0, %s198
      %s199 = sphi 0, %s196
      %s200 = sphi 0, %s199
      %s216 = sphi 0, %s200
    $region4: #{tpu_custom_call.1} parent=1 // loop_header_branch
      %23 = sbr.rel (%p21) target = $region8
    $region5: #{tpu_custom_call.1} parent=1 // loop_body
      %s25 = ssub.s32 %s20, 1
      %s26 = ssub.s32 %s20, 2
      %s33 = sadd.s32 1, %s28
      %p34 = scmp.ge.s32.totalorder %s33, 2
      %s35 = scalar_select %p34, 0, %s33
      %s36 = sadd.s32 1, %s27
      %s37 = scalar_select %p34, %s36, %s27
      %p38 = scmp.ge.s32.totalorder %s37, 2
      %s39 = scalar_select %p38, 0, %s37
      %s40 = ssub.s32 %s27, %s39
      %s41 = ssub.s32 %s28, %s35
      %s42 = sor.u32 %s40, %s41
      %p43 = scmp.eq.s32.totalorder %s42, 0
      %s45 = sadd.s32 %s44, 1
      %s46 = scalar_select %p43, %s44, %s45
      %p49 = pneg %p43
      %p50 = scmp.eq.s32.totalorder %s20, 3
      %p51 = por %p49, %p50
      %p52 = scmp.ne.s32.totalorder %s44, %s47
      %p53 = scmp.eq.s32.totalorder %s20, 0
      %p54 = por %p52, %p53
      %p55 = scmp.ne.s32.totalorder %s44, %s47
      %p56 = scmp.eq.s32.totalorder %s25, 3
      %p57 = por %p55, %p56
      %p58 = scmp.ne.s32.totalorder %s47, %s48
      %p59 = scmp.eq.s32.totalorder %s25, 0
      %p60 = por %p58, %p59
      %p61 = scmp.ne.s32.totalorder %s47, %s48
      %p62 = scmp.eq.s32.totalorder %s26, 3
      %p63 = por %p61, %p62
      %p65 = scmp.ne.s32.totalorder %s48, %s64
      %p66 = scmp.eq.s32.totalorder %s26, 0
      %p67 = por %p65, %p66
      %s69 = sadd.s32 %s68, 1
      %p72 = scmp.eq.s32.totalorder %s20, 3
      %p73 = scmp.ne.s32.totalorder %s68, %s70
      %p74 = scmp.eq.s32.totalorder %s20, 0
      %p75 = por %p73, %p74
      %p76 = scmp.ne.s32.totalorder %s68, %s70
      %p77 = scmp.eq.s32.totalorder %s25, 3
      %p78 = por %p76, %p77
      %p79 = scmp.ne.s32.totalorder %s70, %s71
      %p80 = scmp.eq.s32.totalorder %s25, 0
      %p81 = por %p79, %p80
      %p82 = scmp.ne.s32.totalorder %s70, %s71
      %p83 = scmp.eq.s32.totalorder %s26, 3
      %p84 = por %p82, %p83
      %p86 = scmp.ne.s32.totalorder %s71, %s85
      %p87 = scmp.eq.s32.totalorder %s26, 0
      %p88 = por %p86, %p87
      %s90 = sadd.s32 %s89, 1
      %p93 = scmp.eq.s32.totalorder %s20, 3
      %p94 = scmp.ne.s32.totalorder %s89, %s91
      %p95 = scmp.eq.s32.totalorder %s20, 0
      %p96 = por %p94, %p95
      %p97 = scmp.ne.s32.totalorder %s89, %s91
      %p98 = scmp.eq.s32.totalorder %s25, 3
      %p99 = por %p97, %p98
      %p100 = scmp.ne.s32.totalorder %s91, %s92
      %p101 = scmp.eq.s32.totalorder %s25, 0
      %p102 = por %p100, %p101
      %p103 = scmp.ne.s32.totalorder %s91, %s92
      %p104 = scmp.eq.s32.totalorder %s26, 3
      %p105 = por %p103, %p104
      %p107 = scmp.ne.s32.totalorder %s92, %s106
      %p108 = scmp.eq.s32.totalorder %s26, 0
      %p109 = por %p107, %p108
      %s111 = sadd.s32 %s110, 1
      %p114 = scmp.eq.s32.totalorder %s20, 3
      %p115 = scmp.ne.s32.totalorder %s110, %s112
      %p116 = scmp.eq.s32.totalorder %s20, 0
      %p117 = por %p115, %p116
      %p118 = scmp.ne.s32.totalorder %s110, %s112
      %p119 = scmp.eq.s32.totalorder %s25, 3
      %p120 = por %p118, %p119
      %p121 = scmp.ne.s32.totalorder %s112, %s113
      %p122 = scmp.eq.s32.totalorder %s25, 0
      %p123 = por %p121, %p122
      %p124 = scmp.ne.s32.totalorder %s112, %s113
      %p125 = scmp.eq.s32.totalorder %s26, 3
      %p126 = por %p124, %p125
      %p128 = scmp.ne.s32.totalorder %s113, %s127
      %p129 = scmp.eq.s32.totalorder %s26, 0
      %p130 = por %p128, %p129
      %s132 = sadd.s32 %s131, 1
      %p135 = scmp.eq.s32.totalorder %s20, 3
      %p136 = scmp.ne.s32.totalorder %s131, %s133
      %p137 = scmp.eq.s32.totalorder %s20, 0
      %p138 = por %p136, %p137
      %p139 = scmp.ne.s32.totalorder %s131, %s133
      %p140 = scmp.eq.s32.totalorder %s25, 3
      %p141 = por %p139, %p140
      %p142 = scmp.ne.s32.totalorder %s133, %s134
      %p143 = scmp.eq.s32.totalorder %s25, 0
      %p144 = por %p142, %p143
      %p145 = scmp.ne.s32.totalorder %s133, %s134
      %p146 = scmp.eq.s32.totalorder %s26, 3
      %p147 = por %p145, %p146
      %p149 = scmp.ne.s32.totalorder %s134, %s148
      %p150 = scmp.eq.s32.totalorder %s26, 0
      %p151 = por %p149, %p150
      %s153 = sadd.s32 %s152, 1
      %p156 = scmp.eq.s32.totalorder %s20, 3
      %p157 = scmp.ne.s32.totalorder %s152, %s154
      %p158 = scmp.eq.s32.totalorder %s20, 0
      %p159 = por %p157, %p158
      %p160 = scmp.ne.s32.totalorder %s152, %s154
      %p161 = scmp.eq.s32.totalorder %s25, 3
      %p162 = por %p160, %p161
      %p163 = scmp.ne.s32.totalorder %s154, %s155
      %p164 = scmp.eq.s32.totalorder %s25, 0
      %p165 = por %p163, %p164
      %p166 = scmp.ne.s32.totalorder %s154, %s155
      %p167 = scmp.eq.s32.totalorder %s26, 3
      %p168 = por %p166, %p167
      %p170 = scmp.ne.s32.totalorder %s155, %s169
      %p171 = scmp.eq.s32.totalorder %s26, 0
      %p172 = por %p170, %p171
      %s174 = sadd.s32 %s173, 1
      %p177 = scmp.eq.s32.totalorder %s20, 3
      %p178 = scmp.ne.s32.totalorder %s173, %s175
      %p179 = scmp.eq.s32.totalorder %s20, 0
      %p180 = por %p178, %p179
      %p181 = scmp.ne.s32.totalorder %s173, %s175
      %p182 = scmp.eq.s32.totalorder %s25, 3
      %p183 = por %p181, %p182
      %p184 = scmp.ne.s32.totalorder %s175, %s176
      %p185 = scmp.eq.s32.totalorder %s25, 0
      %p186 = por %p184, %p185
      %p187 = scmp.ne.s32.totalorder %s175, %s176
      %p188 = scmp.eq.s32.totalorder %s26, 3
      %p189 = por %p187, %p188
      %p191 = scmp.ne.s32.totalorder %s176, %s190
      %p192 = scmp.eq.s32.totalorder %s26, 0
      %p193 = por %p191, %p192
      %s194 = ssub.s32 %s27, %s39
      %p195 = scmp.eq.s32.totalorder %s194, 0
      %s197 = sadd.s32 %s196, 1
      %s198 = scalar_select %p195, %s196, %s197
      %p201 = pneg %p195
      %p202 = scmp.eq.s32.totalorder %s20, 3
      %p203 = por %p201, %p202
      %p204 = scmp.ne.s32.totalorder %s196, %s199
      %p205 = scmp.eq.s32.totalorder %s20, 0
      %p206 = por %p204, %p205
      %p207 = scmp.ne.s32.totalorder %s196, %s199
      %p208 = scmp.eq.s32.totalorder %s25, 3
      %p209 = por %p207, %p208
      %p210 = scmp.ne.s32.totalorder %s199, %s200
      %p211 = scmp.eq.s32.totalorder %s25, 0
      %p212 = por %p210, %p211
      %p213 = scmp.ne.s32.totalorder %s199, %s200
      %p214 = scmp.eq.s32.totalorder %s26, 3
      %p215 = por %p213, %p214
      %p217 = scmp.ne.s32.totalorder %s200, %s216
      %p218 = scmp.eq.s32.totalorder %s26, 0
      %p219 = por %p217, %p218
      %p220 = scmp.le.s32.totalorder 1, %s20
      %p221 = scmp.lt.s32.totalorder %s20, 5
      %p222 = pnand %p220, %p221
      %p223 = pneg %p222
      // Predicated region
      $region9: #{tpu_custom_call.1} parent=5 // pred_check
        _
      $region10: #{tpu_custom_call.1} parent=5 // pred_check_branch
        %225 = sbr.rel (%p222) target = $region12
      $region11: #{tpu_custom_call.1} parent=5 // pred_region
        %s226 = ssub.s32 %s20, 1
        // Predicated region
        $region13: #{tpu_custom_call.1} parent=11 // pred_check
          %p227 = pneg %p81
        $region14: #{tpu_custom_call.1} parent=11 // pred_check_branch
          %229 = sbr.rel (%p227) target = $region16
        $region15: #{tpu_custom_call.1} parent=11 // pred_region
          _
        $region16: #{tpu_custom_call.1} parent=11 // pred_fallthru
          _
        // Predicated region
        $region17: #{tpu_custom_call.1} parent=11 // pred_check
          %p230 = pneg %p102
        $region18: #{tpu_custom_call.1} parent=11 // pred_check_branch
          %232 = sbr.rel (%p230) target = $region20
        $region19: #{tpu_custom_call.1} parent=11 // pred_region
          _
        $region20: #{tpu_custom_call.1} parent=11 // pred_fallthru
          _
        // Predicated region
        $region21: #{tpu_custom_call.1} parent=11 // pred_check
          %p233 = pneg %p123
        $region22: #{tpu_custom_call.1} parent=11 // pred_check_branch
          %235 = sbr.rel (%p233) target = $region24
        $region23: #{tpu_custom_call.1} parent=11 // pred_region
          _
        $region24: #{tpu_custom_call.1} parent=11 // pred_fallthru
          _
        // Predicated region
        $region25: #{tpu_custom_call.1} parent=11 // pred_check
          %p236 = pneg %p144
        $region26: #{tpu_custom_call.1} parent=11 // pred_check_branch
          %238 = sbr.rel (%p236) target = $region28
        $region27: #{tpu_custom_call.1} parent=11 // pred_region
          _
        $region28: #{tpu_custom_call.1} parent=11 // pred_fallthru
          _
        // Predicated region
        $region29: #{tpu_custom_call.1} parent=11 // pred_check
          %p239 = pneg %p165
        $region30: #{tpu_custom_call.1} parent=11 // pred_check_branch
          %241 = sbr.rel (%p239) target = $region32
        $region31: #{tpu_custom_call.1} parent=11 // pred_region
          %s243 = ssub.s32 1024, 1024
          %244 = vsyncadd [#allocation7], %s243
          %s245 = sshll.u32 [#allocation6], 4
          %s246 = int_to_ptr.vmem [resolvable:$true] %s245
          %251 = dma.hbm_to_vmem [thread:$0]  %s5, 1024, %s246, [#allocation7], 64, 64, 4
        $region32: #{tpu_custom_call.1} parent=11 // pred_fallthru
          _
        // Predicated region
        $region33: #{tpu_custom_call.1} parent=11 // pred_check
          %p252 = pneg %p186
        $region34: #{tpu_custom_call.1} parent=11 // pred_check_branch
          %254 = sbr.rel (%p252) target = $region36
        $region35: #{tpu_custom_call.1} parent=11 // pred_region
          _
        $region36: #{tpu_custom_call.1} parent=11 // pred_fallthru
          _
      $region12: #{tpu_custom_call.1} parent=5 // pred_fallthru
        _
      %p255 = scmp.lt.s32.totalorder %s20, 4
      // Predicated region
      $region37: #{tpu_custom_call.1} parent=5 // pred_check
        %p256 = pneg %p255
      $region38: #{tpu_custom_call.1} parent=5 // pred_check_branch
        %258 = sbr.rel (%p256) target = $region40
      $region39: #{tpu_custom_call.1} parent=5 // pred_region
        // Predicated region
        $region41: #{tpu_custom_call.1} parent=39 // pred_check
          %p259 = pneg %p54
        $region42: #{tpu_custom_call.1} parent=39 // pred_check_branch
          %261 = sbr.rel (%p259) target = $region44
        $region43: #{tpu_custom_call.1} parent=39 // pred_region
          %s262 = sand.u32 %s44, 1
          %s263 = scalar_lea.sflag [#allocation4], %s262
          %s264 = sand.u32 %s44, 1
          %s265 = smul.addr %s264, 128
          %s266 = scalar_lea.vmem [#allocation3], %s265
          %s267 = smul.u32 4, %s28
          %s269 = ssub.s32 2048, 2048
          %270 = vsyncadd %s263, %s269
          %s271 = smul.addr %s267, 8
          %s272 = smul.addr %s27, 64
          %s273 = sadd.s32 %s271, %s272
          %s274 = smul.addr %s273, 64
          %s275 = scalar_lea.hbm %s0, %s274
          %s276 = sshll.u32 %s266, 4
          %s277 = int_to_ptr.vmem [resolvable:$true] %s276
          %282 = dma.hbm_to_vmem [thread:$0]  %s275, 2048, %s277, %s263, 64, 64, 4
        $region44: #{tpu_custom_call.1} parent=39 // pred_fallthru
          _
      $region40: #{tpu_custom_call.1} parent=5 // pred_fallthru
        _
      %p283 = scmp.le.s32.totalorder 1, %s20
      %p284 = scmp.lt.s32.totalorder %s20, 5
      %p285 = pnand %p283, %p284
      %p286 = pneg %p285
      // Predicated region
      $region45: #{tpu_custom_call.1} parent=5 // pred_check
        _
      $region46: #{tpu_custom_call.1} parent=5 // pred_check_branch
        %288 = sbr.rel (%p285) target = $region48
      $region47: #{tpu_custom_call.1} parent=5 // pred_region
        %s289 = ssub.s32 %s20, 1
        %s290 = sand.u32 %s47, 1
        %s291 = scalar_lea.sflag [#allocation4], %s290
        %s292 = sand.u32 %s47, 1
        %s293 = smul.addr %s292, 128
        %s294 = scalar_lea.vmem [#allocation3], %s293
        // Predicated region
        $region49: #{tpu_custom_call.1} parent=47 // pred_check
          %p295 = pneg %p60
        $region50: #{tpu_custom_call.1} parent=47 // pred_check_branch
          %297 = sbr.rel (%p295) target = $region52
        $region51: #{tpu_custom_call.1} parent=47 // pred_region
          %298 = dma.done %s291, 2048
        $region52: #{tpu_custom_call.1} parent=47 // pred_fallthru
          _
        // Predicated region
        $region53: #{tpu_custom_call.1} parent=47 // pred_check
          %p299 = pneg %p165
        $region54: #{tpu_custom_call.1} parent=47 // pred_check_branch
          %301 = sbr.rel (%p299) target = $region56
        $region55: #{tpu_custom_call.1} parent=47 // pred_region
          %302 = dma.done [#allocation7], 1024
        $region56: #{tpu_custom_call.1} parent=47 // pred_fallthru
          _
        %s303 = sand.u32 %s47, 1
        %s304 = scalar_lea.sflag [#allocation4], %s303
        %s305 = sand.u32 %s47, 1
        %s306 = smul.addr %s305, 128
        %s307 = scalar_lea.vmem [#allocation3], %s306
        %p308 = pneg %p60
        %p309 = pneg %p57
        %p310 = pneg %p81
        %p311 = pneg %p78
        %p312 = pneg %p102
        %p313 = pneg %p99
        %p314 = pneg %p123
        %p315 = pneg %p120
        %p316 = pneg %p144
        %p317 = pneg %p141
        %p318 = pneg %p165
        %p319 = pneg %p162
        %p320 = pneg %p186
        %p321 = pneg %p183
        %p322 = pneg %p212
        %p323 = pneg %p209
        %s324 = sand.u32 %s199, 1
        %s325 = scalar_lea.sflag [#allocation5], %s324
        %s326 = sand.u32 %s199, 1
        %s327 = smul.addr %s326, 64
        %s328 = scalar_lea.vmem [#allocation8], %s327
        %s329 = smul.u32 4, %s30
        %p331 = scmp.eq.s32.totalorder %s30, 0
        // Predicated region
        $region57: #{tpu_custom_call.1} parent=47 // pred_check
          %p332 = pneg %p331
        $region58: #{tpu_custom_call.1} parent=47 // pred_check_branch
          %334 = sbr.rel (%p332) target = $region60
        $region59: #{tpu_custom_call.1} parent=47 // pred_region
          %335 = vst [vmem:[#allocation2] sm:$0xff] 0.0
          %336 = vst [vmem:[#allocation2 + $0x8] sm:$0xff] 0.0
          %337 = vst [vmem:[#allocation2 + $0x10] sm:$0xff] 0.0
          %338 = vst [vmem:[#allocation2 + $0x18] sm:$0xff] 0.0
          %339 = vst [vmem:[#allocation2 + $0x20] sm:$0xff] 0.0
          %340 = vst [vmem:[#allocation2 + $0x28] sm:$0xff] 0.0
          %341 = vst [vmem:[#allocation2 + $0x30] sm:$0xff] 0.0
          %342 = vst [vmem:[#allocation2 + $0x38] sm:$0xff] 0.0
        $region60: #{tpu_custom_call.1} parent=47 // pred_fallthru
          _
        %v343 = vld [vmem:[#allocation2] sm:$0xff]
        %v344 = vld [vmem:[#allocation2 + $0x8] sm:$0xff]
        %v345 = vld [vmem:[#allocation2 + $0x10] sm:$0xff]
        %v346 = vld [vmem:[#allocation2 + $0x18] sm:$0xff]
        %v347 = vld [vmem:[#allocation2 + $0x20] sm:$0xff]
        %v348 = vld [vmem:[#allocation2 + $0x28] sm:$0xff]
        %v349 = vld [vmem:[#allocation2 + $0x30] sm:$0xff]
        %v350 = vld [vmem:[#allocation2 + $0x38] sm:$0xff]
        %v351 = vld [vmem:[%s294] sm:$0xf]
        %v352 = vld [vmem:[%s294 + $0x4] sm:$0xf]
        %v353 = vld [vmem:[%s294 + $0x8] sm:$0xf]
        %v354 = vld [vmem:[%s294 + $0xc] sm:$0xf]
        %v355 = vld [vmem:[%s294 + $0x10] sm:$0xf]
        %v356 = vld [vmem:[%s294 + $0x14] sm:$0xf]
        %v357 = vld [vmem:[%s294 + $0x18] sm:$0xf]
        %v358 = vld [vmem:[%s294 + $0x1c] sm:$0xf]
        %v359 = vld [vmem:[%s294 + $0x20] sm:$0xf]
        %v360 = vld [vmem:[%s294 + $0x24] sm:$0xf]
        %v361 = vld [vmem:[%s294 + $0x28] sm:$0xf]
        %v362 = vld [vmem:[%s294 + $0x2c] sm:$0xf]
        %v363 = vld [vmem:[%s294 + $0x30] sm:$0xf]
        %v364 = vld [vmem:[%s294 + $0x34] sm:$0xf]
        %v365 = vld [vmem:[%s294 + $0x38] sm:$0xf]
        %v366 = vld [vmem:[%s294 + $0x3c] sm:$0xf]
        %v367 = vld [vmem:[%s294 + $0x40] sm:$0xf]
        %v368 = vld [vmem:[%s294 + $0x44] sm:$0xf]
        %v369 = vld [vmem:[%s294 + $0x48] sm:$0xf]
        %v370 = vld [vmem:[%s294 + $0x4c] sm:$0xf]
        %v371 = vld [vmem:[%s294 + $0x50] sm:$0xf]
        %v372 = vld [vmem:[%s294 + $0x54] sm:$0xf]
        %v373 = vld [vmem:[%s294 + $0x58] sm:$0xf]
        %v374 = vld [vmem:[%s294 + $0x5c] sm:$0xf]
        %v375 = vld [vmem:[%s294 + $0x60] sm:$0xf]
        %v376 = vld [vmem:[%s294 + $0x64] sm:$0xf]
        %v377 = vld [vmem:[%s294 + $0x68] sm:$0xf]
        %v378 = vld [vmem:[%s294 + $0x6c] sm:$0xf]
        %v379 = vld [vmem:[%s294 + $0x70] sm:$0xf]
        %v380 = vld [vmem:[%s294 + $0x74] sm:$0xf]
        %v381 = vld [vmem:[%s294 + $0x78] sm:$0xf]
        %v382 = vld [vmem:[%s294 + $0x7c] sm:$0xf]
        %v383 = vunpack.c.l.bf16 %v351
        %v384 = vunpack.c.l.bf16 %v352
        %v385 = vunpack.c.l.bf16 %v353
        %v386 = vunpack.c.l.bf16 %v354
        %v387 = vunpack.c.l.bf16 %v355
        %v388 = vunpack.c.l.bf16 %v356
        %v389 = vunpack.c.l.bf16 %v357
        %v390 = vunpack.c.l.bf16 %v358
        %v391 = vunpack.c.l.bf16 %v359
        %v392 = vunpack.c.l.bf16 %v360
        %v393 = vunpack.c.l.bf16 %v361
        %v394 = vunpack.c.l.bf16 %v362
        %v395 = vunpack.c.l.bf16 %v363
        %v396 = vunpack.c.l.bf16 %v364
        %v397 = vunpack.c.l.bf16 %v365
        %v398 = vunpack.c.l.bf16 %v366
        %v399 = vunpack.c.l.bf16 %v367
        %v400 = vunpack.c.l.bf16 %v368
        %v401 = vunpack.c.l.bf16 %v369
        %v402 = vunpack.c.l.bf16 %v370
        %v403 = vunpack.c.l.bf16 %v371
        %v404 = vunpack.c.l.bf16 %v372
        %v405 = vunpack.c.l.bf16 %v373
        %v406 = vunpack.c.l.bf16 %v374
        %v407 = vunpack.c.l.bf16 %v375
        %v408 = vunpack.c.l.bf16 %v376
        %v409 = vunpack.c.l.bf16 %v377
        %v410 = vunpack.c.l.bf16 %v378
        %v411 = vunpack.c.l.bf16 %v379
        %v412 = vunpack.c.l.bf16 %v380
        %v413 = vunpack.c.l.bf16 %v381
        %v414 = vunpack.c.l.bf16 %v382
        %v415 = vadd.f32 %v383, %v391
        %v416 = vadd.f32 %v415, %v399
        %v417 = vadd.f32 %v416, %v407
        %v418 = vadd.f32 %v384, %v392
        %v419 = vadd.f32 %v418, %v400
        %v420 = vadd.f32 %v419, %v408
        %v421 = vadd.f32 %v385, %v393
        %v422 = vadd.f32 %v421, %v401
        %v423 = vadd.f32 %v422, %v409
        %v424 = vadd.f32 %v386, %v394
        %v425 = vadd.f32 %v424, %v402
        %v426 = vadd.f32 %v425, %v410
        %v427 = vadd.f32 %v387, %v395
        %v428 = vadd.f32 %v427, %v403
        %v429 = vadd.f32 %v428, %v411
        %v430 = vadd.f32 %v388, %v396
        %v431 = vadd.f32 %v430, %v404
        %v432 = vadd.f32 %v431, %v412
        %v433 = vadd.f32 %v389, %v397
        %v434 = vadd.f32 %v433, %v405
        %v435 = vadd.f32 %v434, %v413
        %v436 = vadd.f32 %v390, %v398
        %v437 = vadd.f32 %v436, %v406
        %v438 = vadd.f32 %v437, %v414
        %v439 = vadd.f32 %v343, %v417
        %v440 = vadd.f32 %v344, %v420
        %v441 = vadd.f32 %v345, %v423
        %v442 = vadd.f32 %v346, %v426
        %v443 = vadd.f32 %v347, %v429
        %v444 = vadd.f32 %v348, %v432
        %v445 = vadd.f32 %v349, %v435
        %v446 = vadd.f32 %v350, %v438
        %447 = vst [vmem:[#allocation2] sm:$0xff] %v439
        %448 = vst [vmem:[#allocation2 + $0x8] sm:$0xff] %v440
        %449 = vst [vmem:[#allocation2 + $0x10] sm:$0xff] %v441
        %450 = vst [vmem:[#allocation2 + $0x18] sm:$0xff] %v442
        %451 = vst [vmem:[#allocation2 + $0x20] sm:$0xff] %v443
        %452 = vst [vmem:[#allocation2 + $0x28] sm:$0xff] %v444
        %453 = vst [vmem:[#allocation2 + $0x30] sm:$0xff] %v445
        %454 = vst [vmem:[#allocation2 + $0x38] sm:$0xff] %v446
        %p455 = scmp.eq.s32.totalorder %s30, 1
        // Predicated region
        $region61: #{tpu_custom_call.1} parent=47 // pred_check
          %p456 = pneg %p455
        $region62: #{tpu_custom_call.1} parent=47 // pred_check_branch
          %458 = sbr.rel (%p456) target = $region64
        $region63: #{tpu_custom_call.1} parent=47 // pred_region
          %v459 = vld [vmem:[#allocation2] sm:$0xff]
          %v460 = vld [vmem:[#allocation2 + $0x8] sm:$0xff]
          %v461 = vld [vmem:[#allocation2 + $0x10] sm:$0xff]
          %v462 = vld [vmem:[#allocation2 + $0x18] sm:$0xff]
          %v463 = vld [vmem:[#allocation2 + $0x20] sm:$0xff]
          %v464 = vld [vmem:[#allocation2 + $0x28] sm:$0xff]
          %v465 = vld [vmem:[#allocation2 + $0x30] sm:$0xff]
          %v466 = vld [vmem:[#allocation2 + $0x38] sm:$0xff]
          %v467 = vpack.c.bf16 %v460, %v459
          %v468 = vpack.c.bf16 %v462, %v461
          %v469 = vpack.c.bf16 %v464, %v463
          %v470 = vpack.c.bf16 %v466, %v465
          %v471 = vld [vmem:[%s1] sm:$0xff]
          %v472 = vld [vmem:[%s1 + $0x8] sm:$0xff]
          %v473 = vld [vmem:[%s1 + $0x10] sm:$0xff]
          %v474 = vld [vmem:[%s1 + $0x18] sm:$0xff]
          %v475 = vld [vmem:[%s1 + $0x20] sm:$0xff]
          %v476 = vld [vmem:[%s1 + $0x28] sm:$0xff]
          %v477 = vld [vmem:[%s1 + $0x30] sm:$0xff]
          %v478 = vld [vmem:[%s1 + $0x38] sm:$0xff]
          %v479 = vld [vmem:[%s1 + $0x40] sm:$0xff]
          %v480 = vld [vmem:[%s1 + $0x48] sm:$0xff]
          %v481 = vld [vmem:[%s1 + $0x50] sm:$0xff]
          %v482 = vld [vmem:[%s1 + $0x58] sm:$0xff]
          %v483 = vld [vmem:[%s1 + $0x60] sm:$0xff]
          %v484 = vld [vmem:[%s1 + $0x68] sm:$0xff]
          %v485 = vld [vmem:[%s1 + $0x70] sm:$0xff]
          %v486 = vld [vmem:[%s1 + $0x78] sm:$0xff]
          %v503 = vunpack.c.l.b16 %v471
          %v504 = vunpack.c.h.b16 %v471
          %v505 = vunpack.c.l.b16 %v472
          %v506 = vunpack.c.h.b16 %v472
          %v507 = vunpack.c.l.b16 %v473
          %v508 = vunpack.c.h.b16 %v473
          %v509 = vunpack.c.l.b16 %v474
          %v510 = vunpack.c.h.b16 %v474
          %v511 = vunpack.c.l.b16 %v475
          %v512 = vunpack.c.h.b16 %v475
          %v513 = vunpack.c.l.b16 %v476
          %v514 = vunpack.c.h.b16 %v476
          %v515 = vunpack.c.l.b16 %v477
          %v516 = vunpack.c.h.b16 %v477
          %v517 = vunpack.c.l.b16 %v478
          %v518 = vunpack.c.h.b16 %v478
          %v519 = vunpack.c.l.b16 %v479
          %v520 = vunpack.c.h.b16 %v479
          %v521 = vunpack.c.l.b16 %v480
          %v522 = vunpack.c.h.b16 %v480
          %v523 = vunpack.c.l.b16 %v481
          %v524 = vunpack.c.h.b16 %v481
          %v525 = vunpack.c.l.b16 %v482
          %v526 = vunpack.c.h.b16 %v482
          %v527 = vunpack.c.l.b16 %v483
          %v528 = vunpack.c.h.b16 %v483
          %v529 = vunpack.c.l.b16 %v484
          %v530 = vunpack.c.h.b16 %v484
          %v531 = vunpack.c.l.b16 %v485
          %v532 = vunpack.c.h.b16 %v485
          %v533 = vunpack.c.l.b16 %v486
          %v534 = vunpack.c.h.b16 %v486
          %v535 = vpack.c.b16 %v505, %v503
          %v536 = vpack.c.b16 %v506, %v504
          %v537 = vpack.c.b16 %v509, %v507
          %v538 = vpack.c.b16 %v510, %v508
          %v539 = vpack.c.b16 %v513, %v511
          %v540 = vpack.c.b16 %v514, %v512
          %v541 = vpack.c.b16 %v517, %v515
          %v542 = vpack.c.b16 %v518, %v516
          %v543 = vpack.c.b16 %v521, %v519
          %v544 = vpack.c.b16 %v522, %v520
          %v545 = vpack.c.b16 %v525, %v523
          %v546 = vpack.c.b16 %v526, %v524
          %v547 = vpack.c.b16 %v529, %v527
          %v548 = vpack.c.b16 %v530, %v528
          %v549 = vpack.c.b16 %v533, %v531
          %v550 = vpack.c.b16 %v534, %v532
          %567 = vmatprep.subr.bf16.mxu0 %v536
          %568 = vmatpush1.bf16.msra.mxu0 %v535
          %569 = vmatprep.subr.bf16.mxu0 %v538
          %570 = vmatpush1.bf16.msra.mxu0 %v537
          %571 = vmatprep.subr.bf16.mxu0 %v540
          %572 = vmatpush1.bf16.msra.mxu0 %v539
          %573 = vmatprep.subr.bf16.mxu0 %v542
          %574 = vmatpush1.bf16.msra.mxu0 %v541
          %575 = vmatprep.subr.bf16.mxu0 %v544
          %576 = vmatpush1.bf16.msra.mxu0 %v543
          %577 = vmatprep.subr.bf16.mxu0 %v546
          %578 = vmatpush1.bf16.msra.mxu0 %v545
          %579 = vmatprep.subr.bf16.mxu0 %v548
          %580 = vmatpush1.bf16.msra.mxu0 %v547
          %581 = vmatprep.subr.bf16.mxu0 %v550
          %582 = vmatpush1.bf16.msra.mxu0 %v549
          %583 = vmatprep.subr.bf16.mxu0 0
          %584 = vmatpush1.bf16.msra.mxu0 0
          %585 = vmatprep.subr.bf16.mxu0 0
          %586 = vmatpush1.bf16.msra.mxu0 0
          %587 = vmatprep.subr.bf16.mxu0 0
          %588 = vmatpush1.bf16.msra.mxu0 0
          %589 = vmatprep.subr.bf16.mxu0 0
          %590 = vmatpush1.bf16.msra.mxu0 0
          %591 = vmatprep.subr.bf16.mxu0 0
          %592 = vmatpush1.bf16.msra.mxu0 0
          %593 = vmatprep.subr.bf16.mxu0 0
          %594 = vmatpush1.bf16.msra.mxu0 0
          %595 = vmatprep.subr.bf16.mxu0 0
          %596 = vmatpush1.bf16.msra.mxu0 0
          %597 = vmatprep.subr.bf16.mxu0 0
          %598 = vmatpush1.bf16.msra.mxu0 0
          %599 = vmatprep.mubr.bf16.mxu0 0
          %600 = vmatmul.mubr.bf16.gmra.mrb[0].mxu0 %v467
          %v601 = vpop.f32.mrb[0].mxu0
          %v602 = vadd.f32 0.0, %v601
          %v603 = vpop.f32.mrb[0].mxu0
          %v604 = vadd.f32 0.0, %v603
          %v605 = vpop.f32.mrb[0].mxu0
          %v606 = vadd.f32 0.0, %v605
          %v607 = vpop.f32.mrb[0].mxu0
          %v608 = vadd.f32 0.0, %v607
          %609 = vmatprep.mubr.bf16.mxu0 0
          %610 = vmatmul.mubr.bf16.gmra.mrb[0].mxu0 %v468
          %v611 = vpop.f32.mrb[0].mxu0
          %v612 = vadd.f32 0.0, %v611
          %v613 = vpop.f32.mrb[0].mxu0
          %v614 = vadd.f32 0.0, %v613
          %v615 = vpop.f32.mrb[0].mxu0
          %v616 = vadd.f32 0.0, %v615
          %v617 = vpop.f32.mrb[0].mxu0
          %v618 = vadd.f32 0.0, %v617
          %619 = vmatprep.mubr.bf16.mxu0 0
          %620 = vmatmul.mubr.bf16.gmra.mrb[0].mxu0 %v469
          %v621 = vpop.f32.mrb[0].mxu0
          %v622 = vadd.f32 0.0, %v621
          %v623 = vpop.f32.mrb[0].mxu0
          %v624 = vadd.f32 0.0, %v623
          %v625 = vpop.f32.mrb[0].mxu0
          %v626 = vadd.f32 0.0, %v625
          %v627 = vpop.f32.mrb[0].mxu0
          %v628 = vadd.f32 0.0, %v627
          %629 = vmatprep.mubr.bf16.mxu0 0
          %630 = vmatmul.mubr.bf16.gmra.mrb[0].mxu0 %v470
          %v631 = vpop.f32.mrb[0].mxu0
          %v632 = vadd.f32 0.0, %v631
          %v633 = vpop.f32.mrb[0].mxu0
          %v634 = vadd.f32 0.0, %v633
          %v635 = vpop.f32.mrb[0].mxu0
          %v636 = vadd.f32 0.0, %v635
          %v637 = vpop.f32.mrb[0].mxu0
          %v638 = vadd.f32 0.0, %v637
          %639 = vdwg.mxu0
          %v640 = vpack.c.bf16 %v606, %v602
          %v641 = vpack.c.bf16 %v616, %v612
          %v642 = vpack.c.bf16 %v626, %v622
          %v643 = vpack.c.bf16 %v636, %v632
          %v644 = vpack.c.bf16 %v608, %v604
          %v645 = vpack.c.bf16 %v618, %v614
          %v646 = vpack.c.bf16 %v628, %v624
          %v647 = vpack.c.bf16 %v638, %v634
          %v648 = vld [vmem:[%s2] sm:$0xf]
          %v649 = vld [vmem:[%s2 + $0x4] sm:$0xf]
          %v650 = vld [vmem:[%s2 + $0x8] sm:$0xf]
          %v651 = vld [vmem:[%s2 + $0xc] sm:$0xf]
          %v652 = vld [vmem:[%s2 + $0x10] sm:$0xf]
          %v653 = vld [vmem:[%s2 + $0x14] sm:$0xf]
          %v654 = vld [vmem:[%s2 + $0x18] sm:$0xf]
          %v655 = vld [vmem:[%s2 + $0x1c] sm:$0xf]
          %v656 = vld [vmem:[%s2 + $0x20] sm:$0xf]
          %v657 = vld [vmem:[%s2 + $0x24] sm:$0xf]
          %v658 = vld [vmem:[%s2 + $0x28] sm:$0xf]
          %v659 = vld [vmem:[%s2 + $0x2c] sm:$0xf]
          %v660 = vld [vmem:[%s2 + $0x30] sm:$0xf]
          %v661 = vld [vmem:[%s2 + $0x34] sm:$0xf]
          %v662 = vld [vmem:[%s2 + $0x38] sm:$0xf]
          %v663 = vld [vmem:[%s2 + $0x3c] sm:$0xf]
          %v664 = vld [vmem:[%s2 + $0x40] sm:$0xf]
          %v665 = vld [vmem:[%s2 + $0x44] sm:$0xf]
          %v666 = vld [vmem:[%s2 + $0x48] sm:$0xf]
          %v667 = vld [vmem:[%s2 + $0x4c] sm:$0xf]
          %v668 = vld [vmem:[%s2 + $0x50] sm:$0xf]
          %v669 = vld [vmem:[%s2 + $0x54] sm:$0xf]
          %v670 = vld [vmem:[%s2 + $0x58] sm:$0xf]
          %v671 = vld [vmem:[%s2 + $0x5c] sm:$0xf]
          %v672 = vld [vmem:[%s3] sm:$0xf]
          %v673 = vld [vmem:[%s3 + $0x4] sm:$0xf]
          %v674 = vld [vmem:[%s3 + $0x8] sm:$0xf]
          %v675 = vld [vmem:[%s3 + $0xc] sm:$0xf]
          %v676 = vld [vmem:[%s3 + $0x10] sm:$0xf]
          %v677 = vld [vmem:[%s3 + $0x14] sm:$0xf]
          %v678 = vld [vmem:[%s3 + $0x18] sm:$0xf]
          %v679 = vld [vmem:[%s3 + $0x1c] sm:$0xf]
          %v680 = vld [vmem:[%s3 + $0x20] sm:$0xf]
          %v681 = vld [vmem:[%s3 + $0x24] sm:$0xf]
          %v682 = vld [vmem:[%s3 + $0x28] sm:$0xf]
          %v683 = vld [vmem:[%s3 + $0x2c] sm:$0xf]
          %v684 = vld [vmem:[%s3 + $0x30] sm:$0xf]
          %v685 = vld [vmem:[%s3 + $0x34] sm:$0xf]
          %v686 = vld [vmem:[%s3 + $0x38] sm:$0xf]
          %v687 = vld [vmem:[%s3 + $0x3c] sm:$0xf]
          %v688 = vld [vmem:[%s3 + $0x40] sm:$0xf]
          %v689 = vld [vmem:[%s3 + $0x44] sm:$0xf]
          %v690 = vld [vmem:[%s3 + $0x48] sm:$0xf]
          %v691 = vld [vmem:[%s3 + $0x4c] sm:$0xf]
          %v692 = vld [vmem:[%s3 + $0x50] sm:$0xf]
          %v693 = vld [vmem:[%s3 + $0x54] sm:$0xf]
          %v694 = vld [vmem:[%s3 + $0x58] sm:$0xf]
          %v695 = vld [vmem:[%s3 + $0x5c] sm:$0xf]
          %v720 = vunpack.c.l.b16 %v672
          %v721 = vunpack.c.l.b16 %v673
          %v722 = vunpack.c.l.b16 %v674
          %v723 = vunpack.c.l.b16 %v675
          %v724 = vunpack.c.l.b16 %v676
          %v725 = vunpack.c.l.b16 %v677
          %v726 = vunpack.c.l.b16 %v678
          %v727 = vunpack.c.l.b16 %v679
          %v728 = vunpack.c.l.b16 %v680
          %v729 = vunpack.c.l.b16 %v681
          %v730 = vunpack.c.l.b16 %v682
          %v731 = vunpack.c.l.b16 %v683
          %v732 = vunpack.c.l.b16 %v684
          %v733 = vunpack.c.l.b16 %v685
          %v734 = vunpack.c.l.b16 %v686
          %v735 = vunpack.c.l.b16 %v687
          %v736 = vunpack.c.l.b16 %v688
          %v737 = vunpack.c.l.b16 %v689
          %v738 = vunpack.c.l.b16 %v690
          %v739 = vunpack.c.l.b16 %v691
          %v740 = vunpack.c.l.b16 %v692
          %v741 = vunpack.c.l.b16 %v693
          %v742 = vunpack.c.l.b16 %v694
          %v743 = vunpack.c.l.b16 %v695
          %v744 = vpack.c.b16 %v721, %v720
          %v745 = vpack.c.b16 %v723, %v722
          %v746 = vpack.c.b16 %v725, %v724
          %v747 = vpack.c.b16 %v727, %v726
          %v748 = vpack.c.b16 %v729, %v728
          %v749 = vpack.c.b16 %v731, %v730
          %v750 = vpack.c.b16 %v733, %v732
          %v751 = vpack.c.b16 %v735, %v734
          %v752 = vpack.c.b16 %v737, %v736
          %v753 = vpack.c.b16 %v739, %v738
          %v754 = vpack.c.b16 %v741, %v740
          %v755 = vpack.c.b16 %v743, %v742
          %vm756 = vcmask 523264
          %v758 = vsel %vm756, %v744, 0
          %v761 = vsel %vm756, %v745, 0
          %v764 = vsel %vm756, %v746, 0
          %v767 = vsel %vm756, %v747, 0
          %v770 = vsel %vm756, %v748, 0
          %v773 = vsel %vm756, %v749, 0
          %v776 = vsel %vm756, %v750, 0
          %v779 = vsel %vm756, %v751, 0
          %v782 = vsel %vm756, %v752, 0
          %v785 = vsel %vm756, %v753, 0
          %v788 = vsel %vm756, %v754, 0
          %v791 = vsel %vm756, %v755, 0
          %793 = vmatprep.subr.bf16.mxu0 0
          %794 = vmatpush1.bf16.msra.mxu0 %v644
          %795 = vmatprep.subr.bf16.mxu0 0
          %796 = vmatpush1.bf16.msra.mxu0 %v645
          %797 = vmatprep.subr.bf16.mxu0 0
          %798 = vmatpush1.bf16.msra.mxu0 %v646
          %799 = vmatprep.subr.bf16.mxu0 0
          %800 = vmatpush1.bf16.msra.mxu0 %v647
          %801 = vmatprep.subr.bf16.mxu0 0
          %802 = vmatpush1.bf16.msra.mxu0 0
          %803 = vmatprep.subr.bf16.mxu0 0
          %804 = vmatpush1.bf16.msra.mxu0 0
          %805 = vmatprep.subr.bf16.mxu0 0
          %806 = vmatpush1.bf16.msra.mxu0 0
          %807 = vmatprep.subr.bf16.mxu0 0
          %808 = vmatpush1.bf16.msra.mxu0 0
          %809 = vmatprep.subr.bf16.mxu0 0
          %810 = vmatpush1.bf16.msra.mxu0 0
          %811 = vmatprep.subr.bf16.mxu0 0
          %812 = vmatpush1.bf16.msra.mxu0 0
          %813 = vmatprep.subr.bf16.mxu0 0
          %814 = vmatpush1.bf16.msra.mxu0 0
          %815 = vmatprep.subr.bf16.mxu0 0
          %816 = vmatpush1.bf16.msra.mxu0 0
          %817 = vmatprep.subr.bf16.mxu0 0
          %818 = vmatpush1.bf16.msra.mxu0 0
          %819 = vmatprep.subr.bf16.mxu0 0
          %820 = vmatpush1.bf16.msra.mxu0 0
          %821 = vmatprep.subr.bf16.mxu0 0
          %822 = vmatpush1.bf16.msra.mxu0 0
          %823 = vmatprep.subr.bf16.mxu0 0
          %824 = vmatpush1.bf16.msra.mxu0 0
          %825 = vmatprep.mubr.bf16.mxu0 0
          %826 = vmatmul.mubr.bf16.gmra.mrb[0].mxu0 %v758
          %v827 = vpop.f32.mrb[0].mxu0
          %v828 = vadd.f32 0.0, %v827
          %v829 = vpop.f32.mrb[0].mxu0
          %v830 = vpop.f32.mrb[0].mxu0
          %v831 = vadd.f32 0.0, %v830
          %v832 = vpop.f32.mrb[0].mxu0
          %833 = vmatprep.mubr.bf16.mxu0 0
          %834 = vmatmul.mubr.bf16.gmra.mrb[0].mxu0 %v761
          %v835 = vpop.f32.mrb[0].mxu0
          %v836 = vadd.f32 0.0, %v835
          %v837 = vpop.f32.mrb[0].mxu0
          %v838 = vpop.f32.mrb[0].mxu0
          %v839 = vadd.f32 0.0, %v838
          %v840 = vpop.f32.mrb[0].mxu0
          %841 = vmatprep.mubr.bf16.mxu0 0
          %842 = vmatmul.mubr.bf16.gmra.mrb[0].mxu0 %v764
          %v843 = vpop.f32.mrb[0].mxu0
          %v844 = vadd.f32 0.0, %v843
          %v845 = vpop.f32.mrb[0].mxu0
          %v846 = vpop.f32.mrb[0].mxu0
          %v847 = vadd.f32 0.0, %v846
          %v848 = vpop.f32.mrb[0].mxu0
          %849 = vmatprep.mubr.bf16.mxu0 0
          %850 = vmatmul.mubr.bf16.gmra.mrb[0].mxu0 %v767
          %v851 = vpop.f32.mrb[0].mxu0
          %v852 = vadd.f32 0.0, %v851
          %v853 = vpop.f32.mrb[0].mxu0
          %v854 = vpop.f32.mrb[0].mxu0
          %v855 = vadd.f32 0.0, %v854
          %v856 = vpop.f32.mrb[0].mxu0
          %857 = vmatprep.mubr.bf16.mxu0 0
          %858 = vmatmul.mubr.bf16.gmra.mrb[0].mxu0 %v770
          %v859 = vpop.f32.mrb[0].mxu0
          %v860 = vadd.f32 0.0, %v859
          %v861 = vpop.f32.mrb[0].mxu0
          %v862 = vpop.f32.mrb[0].mxu0
          %v863 = vadd.f32 0.0, %v862
          %v864 = vpop.f32.mrb[0].mxu0
          %865 = vmatprep.mubr.bf16.mxu0 0
          %866 = vmatmul.mubr.bf16.gmra.mrb[0].mxu0 %v773
          %v867 = vpop.f32.mrb[0].mxu0
          %v868 = vadd.f32 0.0, %v867
          %v869 = vpop.f32.mrb[0].mxu0
          %v870 = vpop.f32.mrb[0].mxu0
          %v871 = vadd.f32 0.0, %v870
          %v872 = vpop.f32.mrb[0].mxu0
          %873 = vmatprep.mubr.bf16.mxu0 0
          %874 = vmatmul.mubr.bf16.gmra.mrb[0].mxu0 %v776
          %v875 = vpop.f32.mrb[0].mxu0
          %v876 = vadd.f32 0.0, %v875
          %v877 = vpop.f32.mrb[0].mxu0
          %v878 = vpop.f32.mrb[0].mxu0
          %v879 = vadd.f32 0.0, %v878
          %v880 = vpop.f32.mrb[0].mxu0
          %881 = vmatprep.mubr.bf16.mxu0 0
          %882 = vmatmul.mubr.bf16.gmra.mrb[0].mxu0 %v779
          %v883 = vpop.f32.mrb[0].mxu0
          %v884 = vadd.f32 0.0, %v883
          %v885 = vpop.f32.mrb[0].mxu0
          %v886 = vpop.f32.mrb[0].mxu0
          %v887 = vadd.f32 0.0, %v886
          %v888 = vpop.f32.mrb[0].mxu0
          %889 = vmatprep.mubr.bf16.mxu0 0
          %890 = vmatmul.mubr.bf16.gmra.mrb[0].mxu0 %v782
          %v891 = vpop.f32.mrb[0].mxu0
          %v892 = vadd.f32 0.0, %v891
          %v893 = vpop.f32.mrb[0].mxu0
          %v894 = vpop.f32.mrb[0].mxu0
          %v895 = vadd.f32 0.0, %v894
          %v896 = vpop.f32.mrb[0].mxu0
          %897 = vmatprep.mubr.bf16.mxu0 0
          %898 = vmatmul.mubr.bf16.gmra.mrb[0].mxu0 %v785
          %v899 = vpop.f32.mrb[0].mxu0
          %v900 = vadd.f32 0.0, %v899
          %v901 = vpop.f32.mrb[0].mxu0
          %v902 = vpop.f32.mrb[0].mxu0
          %v903 = vadd.f32 0.0, %v902
          %v904 = vpop.f32.mrb[0].mxu0
          %905 = vmatprep.mubr.bf16.mxu0 0
          %906 = vmatmul.mubr.bf16.gmra.mrb[0].mxu0 %v788
          %v907 = vpop.f32.mrb[0].mxu0
          %v908 = vadd.f32 0.0, %v907
          %v909 = vpop.f32.mrb[0].mxu0
          %v910 = vpop.f32.mrb[0].mxu0
          %v911 = vadd.f32 0.0, %v910
          %v912 = vpop.f32.mrb[0].mxu0
          %913 = vmatprep.mubr.bf16.mxu0 0
          %914 = vmatmul.mubr.bf16.gmra.mrb[0].mxu0 %v791
          %v915 = vpop.f32.mrb[0].mxu0
          %v916 = vadd.f32 0.0, %v915
          %v917 = vpop.f32.mrb[0].mxu0
          %v918 = vpop.f32.mrb[0].mxu0
          %v919 = vadd.f32 0.0, %v918
          %v920 = vpop.f32.mrb[0].mxu0
          %921 = vdwg.mxu0
          %v946 = vunpack.c.l.b16 %v648
          %v947 = vunpack.c.l.b16 %v649
          %v948 = vunpack.c.l.b16 %v650
          %v949 = vunpack.c.l.b16 %v651
          %v950 = vunpack.c.l.b16 %v652
          %v951 = vunpack.c.l.b16 %v653
          %v952 = vunpack.c.l.b16 %v654
          %v953 = vunpack.c.l.b16 %v655
          %v954 = vunpack.c.l.b16 %v656
          %v955 = vunpack.c.l.b16 %v657
          %v956 = vunpack.c.l.b16 %v658
          %v957 = vunpack.c.l.b16 %v659
          %v958 = vunpack.c.l.b16 %v660
          %v959 = vunpack.c.l.b16 %v661
          %v960 = vunpack.c.l.b16 %v662
          %v961 = vunpack.c.l.b16 %v663
          %v962 = vunpack.c.l.b16 %v664
          %v963 = vunpack.c.l.b16 %v665
          %v964 = vunpack.c.l.b16 %v666
          %v965 = vunpack.c.l.b16 %v667
          %v966 = vunpack.c.l.b16 %v668
          %v967 = vunpack.c.l.b16 %v669
          %v968 = vunpack.c.l.b16 %v670
          %v969 = vunpack.c.l.b16 %v671
          %v970 = vpack.c.b16 %v947, %v946
          %v971 = vpack.c.b16 %v949, %v948
          %v972 = vpack.c.b16 %v951, %v950
          %v973 = vpack.c.b16 %v953, %v952
          %v974 = vpack.c.b16 %v955, %v954
          %v975 = vpack.c.b16 %v957, %v956
          %v976 = vpack.c.b16 %v959, %v958
          %v977 = vpack.c.b16 %v961, %v960
          %v978 = vpack.c.b16 %v963, %v962
          %v979 = vpack.c.b16 %v965, %v964
          %v980 = vpack.c.b16 %v967, %v966
          %v981 = vpack.c.b16 %v969, %v968
          %v983 = vsel %vm756, %v970, 0
          %v986 = vsel %vm756, %v971, 0
          %v989 = vsel %vm756, %v972, 0
          %v992 = vsel %vm756, %v973, 0
          %v995 = vsel %vm756, %v974, 0
          %v998 = vsel %vm756, %v975, 0
          %v1001 = vsel %vm756, %v976, 0
          %v1004 = vsel %vm756, %v977, 0
          %v1007 = vsel %vm756, %v978, 0
          %v1010 = vsel %vm756, %v979, 0
          %v1013 = vsel %vm756, %v980, 0
          %v1016 = vsel %vm756, %v981, 0
          %1018 = vmatprep.subr.bf16.mxu0 0
          %1019 = vmatpush1.bf16.msra.mxu0 %v640
          %1020 = vmatprep.subr.bf16.mxu0 0
          %1021 = vmatpush1.bf16.msra.mxu0 %v641
          %1022 = vmatprep.subr.bf16.mxu0 0
          %1023 = vmatpush1.bf16.msra.mxu0 %v642
          %1024 = vmatprep.subr.bf16.mxu0 0
          %1025 = vmatpush1.bf16.msra.mxu0 %v643
          %1026 = vmatprep.subr.bf16.mxu0 0
          %1027 = vmatpush1.bf16.msra.mxu0 0
          %1028 = vmatprep.subr.bf16.mxu0 0
          %1029 = vmatpush1.bf16.msra.mxu0 0
          %1030 = vmatprep.subr.bf16.mxu0 0
          %1031 = vmatpush1.bf16.msra.mxu0 0
          %1032 = vmatprep.subr.bf16.mxu0 0
          %1033 = vmatpush1.bf16.msra.mxu0 0
          %1034 = vmatprep.subr.bf16.mxu0 0
          %1035 = vmatpush1.bf16.msra.mxu0 0
          %1036 = vmatprep.subr.bf16.mxu0 0
          %1037 = vmatpush1.bf16.msra.mxu0 0
          %1038 = vmatprep.subr.bf16.mxu0 0
          %1039 = vmatpush1.bf16.msra.mxu0 0
          %1040 = vmatprep.subr.bf16.mxu0 0
          %1041 = vmatpush1.bf16.msra.mxu0 0
          %1042 = vmatprep.subr.bf16.mxu0 0
          %1043 = vmatpush1.bf16.msra.mxu0 0
          %1044 = vmatprep.subr.bf16.mxu0 0
          %1045 = vmatpush1.bf16.msra.mxu0 0
          %1046 = vmatprep.subr.bf16.mxu0 0
          %1047 = vmatpush1.bf16.msra.mxu0 0
          %1048 = vmatprep.subr.bf16.mxu0 0
          %1049 = vmatpush1.bf16.msra.mxu0 0
          %1050 = vmatprep.mubr.bf16.mxu0 0
          %1051 = vmatmul.mubr.bf16.gmra.mrb[0].mxu0 %v983
          %v1052 = vpop.f32.mrb[0].mxu0
          %v1053 = vadd.f32 %v828, %v1052
          %v1054 = vpop.f32.mrb[0].mxu0
          %v1055 = vpop.f32.mrb[0].mxu0
          %v1056 = vadd.f32 %v831, %v1055
          %v1057 = vpop.f32.mrb[0].mxu0
          %1058 = vmatprep.mubr.bf16.mxu0 0
          %1059 = vmatmul.mubr.bf16.gmra.mrb[0].mxu0 %v986
          %v1060 = vpop.f32.mrb[0].mxu0
          %v1061 = vadd.f32 %v836, %v1060
          %v1062 = vpop.f32.mrb[0].mxu0
          %v1063 = vpop.f32.mrb[0].mxu0
          %v1064 = vadd.f32 %v839, %v1063
          %v1065 = vpop.f32.mrb[0].mxu0
          %1066 = vmatprep.mubr.bf16.mxu0 0
          %1067 = vmatmul.mubr.bf16.gmra.mrb[0].mxu0 %v989
          %v1068 = vpop.f32.mrb[0].mxu0
          %v1069 = vadd.f32 %v844, %v1068
          %v1070 = vpop.f32.mrb[0].mxu0
          %v1071 = vpop.f32.mrb[0].mxu0
          %v1072 = vadd.f32 %v847, %v1071
          %v1073 = vpop.f32.mrb[0].mxu0
          %1074 = vmatprep.mubr.bf16.mxu0 0
          %1075 = vmatmul.mubr.bf16.gmra.mrb[0].mxu0 %v992
          %v1076 = vpop.f32.mrb[0].mxu0
          %v1077 = vadd.f32 %v852, %v1076
          %v1078 = vpop.f32.mrb[0].mxu0
          %v1079 = vpop.f32.mrb[0].mxu0
          %v1080 = vadd.f32 %v855, %v1079
          %v1081 = vpop.f32.mrb[0].mxu0
          %1082 = vmatprep.mubr.bf16.mxu0 0
          %1083 = vmatmul.mubr.bf16.gmra.mrb[0].mxu0 %v995
          %v1084 = vpop.f32.mrb[0].mxu0
          %v1085 = vadd.f32 %v860, %v1084
          %v1086 = vpop.f32.mrb[0].mxu0
          %v1087 = vpop.f32.mrb[0].mxu0
          %v1088 = vadd.f32 %v863, %v1087
          %v1089 = vpop.f32.mrb[0].mxu0
          %1090 = vmatprep.mubr.bf16.mxu0 0
          %1091 = vmatmul.mubr.bf16.gmra.mrb[0].mxu0 %v998
          %v1092 = vpop.f32.mrb[0].mxu0
          %v1093 = vadd.f32 %v868, %v1092
          %v1094 = vpop.f32.mrb[0].mxu0
          %v1095 = vpop.f32.mrb[0].mxu0
          %v1096 = vadd.f32 %v871, %v1095
          %v1097 = vpop.f32.mrb[0].mxu0
          %1098 = vmatprep.mubr.bf16.mxu0 0
          %1099 = vmatmul.mubr.bf16.gmra.mrb[0].mxu0 %v1001
          %v1100 = vpop.f32.mrb[0].mxu0
          %v1101 = vadd.f32 %v876, %v1100
          %v1102 = vpop.f32.mrb[0].mxu0
          %v1103 = vpop.f32.mrb[0].mxu0
          %v1104 = vadd.f32 %v879, %v1103
          %v1105 = vpop.f32.mrb[0].mxu0
          %1106 = vmatprep.mubr.bf16.mxu0 0
          %1107 = vmatmul.mubr.bf16.gmra.mrb[0].mxu0 %v1004
          %v1108 = vpop.f32.mrb[0].mxu0
          %v1109 = vadd.f32 %v884, %v1108
          %v1110 = vpop.f32.mrb[0].mxu0
          %v1111 = vpop.f32.mrb[0].mxu0
          %v1112 = vadd.f32 %v887, %v1111
          %v1113 = vpop.f32.mrb[0].mxu0
          %1114 = vmatprep.mubr.bf16.mxu0 0
          %1115 = vmatmul.mubr.bf16.gmra.mrb[0].mxu0 %v1007
          %v1116 = vpop.f32.mrb[0].mxu0
          %v1117 = vadd.f32 %v892, %v1116
          %v1118 = vpop.f32.mrb[0].mxu0
          %v1119 = vpop.f32.mrb[0].mxu0
          %v1120 = vadd.f32 %v895, %v1119
          %v1121 = vpop.f32.mrb[0].mxu0
          %1122 = vmatprep.mubr.bf16.mxu0 0
          %1123 = vmatmul.mubr.bf16.gmra.mrb[0].mxu0 %v1010
          %v1124 = vpop.f32.mrb[0].mxu0
          %v1125 = vadd.f32 %v900, %v1124
          %v1126 = vpop.f32.mrb[0].mxu0
          %v1127 = vpop.f32.mrb[0].mxu0
          %v1128 = vadd.f32 %v903, %v1127
          %v1129 = vpop.f32.mrb[0].mxu0
          %1130 = vmatprep.mubr.bf16.mxu0 0
          %1131 = vmatmul.mubr.bf16.gmra.mrb[0].mxu0 %v1013
          %v1132 = vpop.f32.mrb[0].mxu0
          %v1133 = vadd.f32 %v908, %v1132
          %v1134 = vpop.f32.mrb[0].mxu0
          %v1135 = vpop.f32.mrb[0].mxu0
          %v1136 = vadd.f32 %v911, %v1135
          %v1137 = vpop.f32.mrb[0].mxu0
          %1138 = vmatprep.mubr.bf16.mxu0 0
          %1139 = vmatmul.mubr.bf16.gmra.mrb[0].mxu0 %v1016
          %v1140 = vpop.f32.mrb[0].mxu0
          %v1141 = vadd.f32 %v916, %v1140
          %v1142 = vpop.f32.mrb[0].mxu0
          %v1143 = vpop.f32.mrb[0].mxu0
          %v1144 = vadd.f32 %v919, %v1143
          %v1145 = vpop.f32.mrb[0].mxu0
          %1146 = vdwg.mxu0
          %v1147 = vld [vmem:[%s6] sm:$0x1]
          %v1148 = vpack.c.bf16 %v1056, %v1053
          %v1149 = vpack.c.bf16 %v1064, %v1061
          %v1150 = vpack.c.bf16 %v1072, %v1069
          %v1151 = vpack.c.bf16 %v1080, %v1077
          %v1152 = vld [vmem:[%s4] sm:$0xf]
          %v1153 = vld [vmem:[%s4 + $0x4] sm:$0xf]
          %v1154 = vld [vmem:[%s4 + $0x8] sm:$0xf]
          %v1155 = vld [vmem:[%s4 + $0xc] sm:$0xf]
          %v1156 = vld [vmem:[%s4 + $0x10] sm:$0xf]
          %v1157 = vld [vmem:[%s4 + $0x14] sm:$0xf]
          %v1158 = vld [vmem:[%s4 + $0x18] sm:$0xf]
          %v1159 = vld [vmem:[%s4 + $0x1c] sm:$0xf]
          %v1160 = vld [vmem:[%s4 + $0x20] sm:$0xf]
          %v1161 = vld [vmem:[%s4 + $0x24] sm:$0xf]
          %v1162 = vld [vmem:[%s4 + $0x28] sm:$0xf]
          %v1163 = vld [vmem:[%s4 + $0x2c] sm:$0xf]
          %v1164 = vld [vmem:[%s4 + $0x30] sm:$0xf]
          %v1165 = vld [vmem:[%s4 + $0x34] sm:$0xf]
          %v1166 = vld [vmem:[%s4 + $0x38] sm:$0xf]
          %v1167 = vld [vmem:[%s4 + $0x3c] sm:$0xf]
          %v1184 = vunpack.c.l.b16 %v1152
          %v1185 = vunpack.c.l.b16 %v1153
          %v1186 = vunpack.c.l.b16 %v1154
          %v1187 = vunpack.c.l.b16 %v1155
          %v1188 = vunpack.c.l.b16 %v1156
          %v1189 = vunpack.c.l.b16 %v1157
          %v1190 = vunpack.c.l.b16 %v1158
          %v1191 = vunpack.c.l.b16 %v1159
          %v1192 = vunpack.c.l.b16 %v1160
          %v1193 = vunpack.c.l.b16 %v1161
          %v1194 = vunpack.c.l.b16 %v1162
          %v1195 = vunpack.c.l.b16 %v1163
          %v1196 = vunpack.c.l.b16 %v1164
          %v1197 = vunpack.c.l.b16 %v1165
          %v1198 = vunpack.c.l.b16 %v1166
          %v1199 = vunpack.c.l.b16 %v1167
          %v1200 = vpack.c.b16 %v1185, %v1184
          %v1201 = vpack.c.b16 %v1187, %v1186
          %v1202 = vpack.c.b16 %v1189, %v1188
          %v1203 = vpack.c.b16 %v1191, %v1190
          %v1204 = vpack.c.b16 %v1193, %v1192
          %v1205 = vpack.c.b16 %v1195, %v1194
          %v1206 = vpack.c.b16 %v1197, %v1196
          %v1207 = vpack.c.b16 %v1199, %v1198
          %1216 = vmatprep.subr.bf16.mxu0 0
          %1217 = vmatpush1.bf16.msra.mxu0 %v1200
          %1218 = vmatprep.subr.bf16.mxu0 0
          %1219 = vmatpush1.bf16.msra.mxu0 %v1201
          %1220 = vmatprep.subr.bf16.mxu0 0
          %1221 = vmatpush1.bf16.msra.mxu0 %v1202
          %1222 = vmatprep.subr.bf16.mxu0 0
          %1223 = vmatpush1.bf16.msra.mxu0 %v1203
          %1224 = vmatprep.subr.bf16.mxu0 0
          %1225 = vmatpush1.bf16.msra.mxu0 %v1204
          %1226 = vmatprep.subr.bf16.mxu0 0
          %1227 = vmatpush1.bf16.msra.mxu0 %v1205
          %1228 = vmatprep.subr.bf16.mxu0 0
          %1229 = vmatpush1.bf16.msra.mxu0 %v1206
          %1230 = vmatprep.subr.bf16.mxu0 0
          %1231 = vmatpush1.bf16.msra.mxu0 %v1207
          %1232 = vmatprep.subr.bf16.mxu0 0
          %1233 = vmatpush1.bf16.msra.mxu0 0
          %1234 = vmatprep.subr.bf16.mxu0 0
          %1235 = vmatpush1.bf16.msra.mxu0 0
          %1236 = vmatprep.subr.bf16.mxu0 0
          %1237 = vmatpush1.bf16.msra.mxu0 0
          %1238 = vmatprep.subr.bf16.mxu0 0
          %1239 = vmatpush1.bf16.msra.mxu0 0
          %1240 = vmatprep.subr.bf16.mxu0 0
          %1241 = vmatpush1.bf16.msra.mxu0 0
          %1242 = vmatprep.subr.bf16.mxu0 0
          %1243 = vmatpush1.bf16.msra.mxu0 0
          %1244 = vmatprep.subr.bf16.mxu0 0
          %1245 = vmatpush1.bf16.msra.mxu0 0
          %1246 = vmatprep.subr.bf16.mxu0 0
          %1247 = vmatpush1.bf16.msra.mxu0 0
          %1248 = vmatprep.mubr.bf16.mxu0 0
          %1249 = vmatmul.mubr.bf16.gmra.mrb[0].mxu0 %v1148
          %v1250 = vpop.f32.mrb[0].mxu0
          %v1251 = vadd.f32 0.0, %v1250
          %v1252 = vpop.f32.mrb[0].mxu0
          %v1253 = vpop.f32.mrb[0].mxu0
          %v1254 = vadd.f32 0.0, %v1253
          %v1255 = vpop.f32.mrb[0].mxu0
          %1256 = vmatprep.mubr.bf16.mxu0 0
          %1257 = vmatmul.mubr.bf16.gmra.mrb[0].mxu0 %v1149
          %v1258 = vpop.f32.mrb[0].mxu0
          %v1259 = vadd.f32 0.0, %v1258
          %v1260 = vpop.f32.mrb[0].mxu0
          %v1261 = vpop.f32.mrb[0].mxu0
          %v1262 = vadd.f32 0.0, %v1261
          %v1263 = vpop.f32.mrb[0].mxu0
          %1264 = vmatprep.mubr.bf16.mxu0 0
          %1265 = vmatmul.mubr.bf16.gmra.mrb[0].mxu0 %v1150
          %v1266 = vpop.f32.mrb[0].mxu0
          %v1267 = vadd.f32 0.0, %v1266
          %v1268 = vpop.f32.mrb[0].mxu0
          %v1269 = vpop.f32.mrb[0].mxu0
          %v1270 = vadd.f32 0.0, %v1269
          %v1271 = vpop.f32.mrb[0].mxu0
          %1272 = vmatprep.mubr.bf16.mxu0 0
          %1273 = vmatmul.mubr.bf16.gmra.mrb[0].mxu0 %v1151
          %v1274 = vpop.f32.mrb[0].mxu0
          %v1275 = vadd.f32 0.0, %v1274
          %v1276 = vpop.f32.mrb[0].mxu0
          %v1277 = vpop.f32.mrb[0].mxu0
          %v1278 = vadd.f32 0.0, %v1277
          %v1279 = vpop.f32.mrb[0].mxu0
          %1280 = vdwg.mxu0
          %v1282 = vlaneseq
          %v1283 = vshrl.u32 %v1282, 7
          %v1284 = vsub.s32 0, %v1283
          %v1285 = vrot.slane %v1147, %v1284
          %v1287 = vadd.f32 %v1285, %v1251
          %v1288 = vadd.f32 %v1285, %v1254
          %v1289 = vadd.f32 %v1285, %v1259
          %v1290 = vadd.f32 %v1285, %v1262
          %v1291 = vadd.f32 %v1285, %v1267
          %v1292 = vadd.f32 %v1285, %v1270
          %v1293 = vadd.f32 %v1285, %v1275
          %v1294 = vadd.f32 %v1285, %v1278
          %v1295 = vpack.c.bf16 %v1088, %v1085
          %v1296 = vpack.c.bf16 %v1096, %v1093
          %v1297 = vpack.c.bf16 %v1104, %v1101
          %v1298 = vpack.c.bf16 %v1112, %v1109
          %s1299 = scalar_lea.vmem %s4, 64
          %v1300 = vld [vmem:[%s1299] sm:$0xf]
          %v1301 = vld [vmem:[%s1299 + $0x4] sm:$0xf]
          %v1302 = vld [vmem:[%s1299 + $0x8] sm:$0xf]
          %v1303 = vld [vmem:[%s1299 + $0xc] sm:$0xf]
          %v1304 = vld [vmem:[%s1299 + $0x10] sm:$0xf]
          %v1305 = vld [vmem:[%s1299 + $0x14] sm:$0xf]
          %v1306 = vld [vmem:[%s1299 + $0x18] sm:$0xf]
          %v1307 = vld [vmem:[%s1299 + $0x1c] sm:$0xf]
          %v1308 = vld [vmem:[%s1299 + $0x20] sm:$0xf]
          %v1309 = vld [vmem:[%s1299 + $0x24] sm:$0xf]
          %v1310 = vld [vmem:[%s1299 + $0x28] sm:$0xf]
          %v1311 = vld [vmem:[%s1299 + $0x2c] sm:$0xf]
          %v1312 = vld [vmem:[%s1299 + $0x30] sm:$0xf]
          %v1313 = vld [vmem:[%s1299 + $0x34] sm:$0xf]
          %v1314 = vld [vmem:[%s1299 + $0x38] sm:$0xf]
          %v1315 = vld [vmem:[%s1299 + $0x3c] sm:$0xf]
          %v1332 = vunpack.c.l.b16 %v1300
          %v1333 = vunpack.c.l.b16 %v1301
          %v1334 = vunpack.c.l.b16 %v1302
          %v1335 = vunpack.c.l.b16 %v1303
          %v1336 = vunpack.c.l.b16 %v1304
          %v1337 = vunpack.c.l.b16 %v1305
          %v1338 = vunpack.c.l.b16 %v1306
          %v1339 = vunpack.c.l.b16 %v1307
          %v1340 = vunpack.c.l.b16 %v1308
          %v1341 = vunpack.c.l.b16 %v1309
          %v1342 = vunpack.c.l.b16 %v1310
          %v1343 = vunpack.c.l.b16 %v1311
          %v1344 = vunpack.c.l.b16 %v1312
          %v1345 = vunpack.c.l.b16 %v1313
          %v1346 = vunpack.c.l.b16 %v1314
          %v1347 = vunpack.c.l.b16 %v1315
          %v1348 = vpack.c.b16 %v1333, %v1332
          %v1349 = vpack.c.b16 %v1335, %v1334
          %v1350 = vpack.c.b16 %v1337, %v1336
          %v1351 = vpack.c.b16 %v1339, %v1338
          %v1352 = vpack.c.b16 %v1341, %v1340
          %v1353 = vpack.c.b16 %v1343, %v1342
          %v1354 = vpack.c.b16 %v1345, %v1344
          %v1355 = vpack.c.b16 %v1347, %v1346
          %1364 = vmatprep.subr.bf16.mxu0 0
          %1365 = vmatpush1.bf16.msra.mxu0 %v1348
          %1366 = vmatprep.subr.bf16.mxu0 0
          %1367 = vmatpush1.bf16.msra.mxu0 %v1349
          %1368 = vmatprep.subr.bf16.mxu0 0
          %1369 = vmatpush1.bf16.msra.mxu0 %v1350
          %1370 = vmatprep.subr.bf16.mxu0 0
          %1371 = vmatpush1.bf16.msra.mxu0 %v1351
          %1372 = vmatprep.subr.bf16.mxu0 0
          %1373 = vmatpush1.bf16.msra.mxu0 %v1352
          %1374 = vmatprep.subr.bf16.mxu0 0
          %1375 = vmatpush1.bf16.msra.mxu0 %v1353
          %1376 = vmatprep.subr.bf16.mxu0 0
          %1377 = vmatpush1.bf16.msra.mxu0 %v1354
          %1378 = vmatprep.subr.bf16.mxu0 0
          %1379 = vmatpush1.bf16.msra.mxu0 %v1355
          %1380 = vmatprep.subr.bf16.mxu0 0
          %1381 = vmatpush1.bf16.msra.mxu0 0
          %1382 = vmatprep.subr.bf16.mxu0 0
          %1383 = vmatpush1.bf16.msra.mxu0 0
          %1384 = vmatprep.subr.bf16.mxu0 0
          %1385 = vmatpush1.bf16.msra.mxu0 0
          %1386 = vmatprep.subr.bf16.mxu0 0
          %1387 = vmatpush1.bf16.msra.mxu0 0
          %1388 = vmatprep.subr.bf16.mxu0 0
          %1389 = vmatpush1.bf16.msra.mxu0 0
          %1390 = vmatprep.subr.bf16.mxu0 0
          %1391 = vmatpush1.bf16.msra.mxu0 0
          %1392 = vmatprep.subr.bf16.mxu0 0
          %1393 = vmatpush1.bf16.msra.mxu0 0
          %1394 = vmatprep.subr.bf16.mxu0 0
          %1395 = vmatpush1.bf16.msra.mxu0 0
          %1396 = vmatprep.mubr.bf16.mxu0 0
          %1397 = vmatmul.mubr.bf16.gmra.mrb[0].mxu0 %v1295
          %v1398 = vpop.f32.mrb[0].mxu0
          %v1399 = vadd.f32 0.0, %v1398
          %v1400 = vpop.f32.mrb[0].mxu0
          %v1401 = vpop.f32.mrb[0].mxu0
          %v1402 = vadd.f32 0.0, %v1401
          %v1403 = vpop.f32.mrb[0].mxu0
          %1404 = vmatprep.mubr.bf16.mxu0 0
          %1405 = vmatmul.mubr.bf16.gmra.mrb[0].mxu0 %v1296
          %v1406 = vpop.f32.mrb[0].mxu0
          %v1407 = vadd.f32 0.0, %v1406
          %v1408 = vpop.f32.mrb[0].mxu0
          %v1409 = vpop.f32.mrb[0].mxu0
          %v1410 = vadd.f32 0.0, %v1409
          %v1411 = vpop.f32.mrb[0].mxu0
          %1412 = vmatprep.mubr.bf16.mxu0 0
          %1413 = vmatmul.mubr.bf16.gmra.mrb[0].mxu0 %v1297
          %v1414 = vpop.f32.mrb[0].mxu0
          %v1415 = vadd.f32 0.0, %v1414
          %v1416 = vpop.f32.mrb[0].mxu0
          %v1417 = vpop.f32.mrb[0].mxu0
          %v1418 = vadd.f32 0.0, %v1417
          %v1419 = vpop.f32.mrb[0].mxu0
          %1420 = vmatprep.mubr.bf16.mxu0 0
          %1421 = vmatmul.mubr.bf16.gmra.mrb[0].mxu0 %v1298
          %v1422 = vpop.f32.mrb[0].mxu0
          %v1423 = vadd.f32 0.0, %v1422
          %v1424 = vpop.f32.mrb[0].mxu0
          %v1425 = vpop.f32.mrb[0].mxu0
          %v1426 = vadd.f32 0.0, %v1425
          %v1427 = vpop.f32.mrb[0].mxu0
          %1428 = vdwg.mxu0
          %v1429 = vadd.f32 %v1287, %v1399
          %v1430 = vadd.f32 %v1288, %v1402
          %v1431 = vadd.f32 %v1289, %v1407
          %v1432 = vadd.f32 %v1290, %v1410
          %v1433 = vadd.f32 %v1291, %v1415
          %v1434 = vadd.f32 %v1292, %v1418
          %v1435 = vadd.f32 %v1293, %v1423
          %v1436 = vadd.f32 %v1294, %v1426
          %v1437 = vpack.c.bf16 %v1120, %v1117
          %v1438 = vpack.c.bf16 %v1128, %v1125
          %v1439 = vpack.c.bf16 %v1136, %v1133
          %v1440 = vpack.c.bf16 %v1144, %v1141
          %s1441 = scalar_lea.vmem %s4, 128
          %v1442 = vld [vmem:[%s1441] sm:$0xf]
          %v1443 = vld [vmem:[%s1441 + $0x4] sm:$0xf]
          %v1444 = vld [vmem:[%s1441 + $0x8] sm:$0xf]
          %v1445 = vld [vmem:[%s1441 + $0xc] sm:$0xf]
          %v1446 = vld [vmem:[%s1441 + $0x10] sm:$0xf]
          %v1447 = vld [vmem:[%s1441 + $0x14] sm:$0xf]
          %v1448 = vld [vmem:[%s1441 + $0x18] sm:$0xf]
          %v1449 = vld [vmem:[%s1441 + $0x1c] sm:$0xf]
          %v1450 = vld [vmem:[%s1441 + $0x20] sm:$0xf]
          %v1451 = vld [vmem:[%s1441 + $0x24] sm:$0xf]
          %v1452 = vld [vmem:[%s1441 + $0x28] sm:$0xf]
          %v1453 = vld [vmem:[%s1441 + $0x2c] sm:$0xf]
          %v1454 = vld [vmem:[%s1441 + $0x30] sm:$0xf]
          %v1455 = vld [vmem:[%s1441 + $0x34] sm:$0xf]
          %v1456 = vld [vmem:[%s1441 + $0x38] sm:$0xf]
          %v1457 = vld [vmem:[%s1441 + $0x3c] sm:$0xf]
          %v1474 = vunpack.c.l.b16 %v1442
          %v1475 = vunpack.c.l.b16 %v1443
          %v1476 = vunpack.c.l.b16 %v1444
          %v1477 = vunpack.c.l.b16 %v1445
          %v1478 = vunpack.c.l.b16 %v1446
          %v1479 = vunpack.c.l.b16 %v1447
          %v1480 = vunpack.c.l.b16 %v1448
          %v1481 = vunpack.c.l.b16 %v1449
          %v1482 = vunpack.c.l.b16 %v1450
          %v1483 = vunpack.c.l.b16 %v1451
          %v1484 = vunpack.c.l.b16 %v1452
          %v1485 = vunpack.c.l.b16 %v1453
          %v1486 = vunpack.c.l.b16 %v1454
          %v1487 = vunpack.c.l.b16 %v1455
          %v1488 = vunpack.c.l.b16 %v1456
          %v1489 = vunpack.c.l.b16 %v1457
          %v1490 = vpack.c.b16 %v1475, %v1474
          %v1491 = vpack.c.b16 %v1477, %v1476
          %v1492 = vpack.c.b16 %v1479, %v1478
          %v1493 = vpack.c.b16 %v1481, %v1480
          %v1494 = vpack.c.b16 %v1483, %v1482
          %v1495 = vpack.c.b16 %v1485, %v1484
          %v1496 = vpack.c.b16 %v1487, %v1486
          %v1497 = vpack.c.b16 %v1489, %v1488
          %1506 = vmatprep.subr.bf16.mxu0 0
          %1507 = vmatpush1.bf16.msra.mxu0 %v1490
          %1508 = vmatprep.subr.bf16.mxu0 0
          %1509 = vmatpush1.bf16.msra.mxu0 %v1491
          %1510 = vmatprep.subr.bf16.mxu0 0
          %1511 = vmatpush1.bf16.msra.mxu0 %v1492
          %1512 = vmatprep.subr.bf16.mxu0 0
          %1513 = vmatpush1.bf16.msra.mxu0 %v1493
          %1514 = vmatprep.subr.bf16.mxu0 0
          %1515 = vmatpush1.bf16.msra.mxu0 %v1494
          %1516 = vmatprep.subr.bf16.mxu0 0
          %1517 = vmatpush1.bf16.msra.mxu0 %v1495
          %1518 = vmatprep.subr.bf16.mxu0 0
          %1519 = vmatpush1.bf16.msra.mxu0 %v1496
          %1520 = vmatprep.subr.bf16.mxu0 0
          %1521 = vmatpush1.bf16.msra.mxu0 %v1497
          %1522 = vmatprep.subr.bf16.mxu0 0
          %1523 = vmatpush1.bf16.msra.mxu0 0
          %1524 = vmatprep.subr.bf16.mxu0 0
          %1525 = vmatpush1.bf16.msra.mxu0 0
          %1526 = vmatprep.subr.bf16.mxu0 0
          %1527 = vmatpush1.bf16.msra.mxu0 0
          %1528 = vmatprep.subr.bf16.mxu0 0
          %1529 = vmatpush1.bf16.msra.mxu0 0
          %1530 = vmatprep.subr.bf16.mxu0 0
          %1531 = vmatpush1.bf16.msra.mxu0 0
          %1532 = vmatprep.subr.bf16.mxu0 0
          %1533 = vmatpush1.bf16.msra.mxu0 0
          %1534 = vmatprep.subr.bf16.mxu0 0
          %1535 = vmatpush1.bf16.msra.mxu0 0
          %1536 = vmatprep.subr.bf16.mxu0 0
          %1537 = vmatpush1.bf16.msra.mxu0 0
          %1538 = vmatprep.mubr.bf16.mxu0 0
          %1539 = vmatmul.mubr.bf16.gmra.mrb[0].mxu0 %v1437
          %v1540 = vpop.f32.mrb[0].mxu0
          %v1541 = vadd.f32 0.0, %v1540
          %v1542 = vpop.f32.mrb[0].mxu0
          %v1543 = vpop.f32.mrb[0].mxu0
          %v1544 = vadd.f32 0.0, %v1543
          %v1545 = vpop.f32.mrb[0].mxu0
          %1546 = vmatprep.mubr.bf16.mxu0 0
          %1547 = vmatmul.mubr.bf16.gmra.mrb[0].mxu0 %v1438
          %v1548 = vpop.f32.mrb[0].mxu0
          %v1549 = vadd.f32 0.0, %v1548
          %v1550 = vpop.f32.mrb[0].mxu0
          %v1551 = vpop.f32.mrb[0].mxu0
          %v1552 = vadd.f32 0.0, %v1551
          %v1553 = vpop.f32.mrb[0].mxu0
          %1554 = vmatprep.mubr.bf16.mxu0 0
          %1555 = vmatmul.mubr.bf16.gmra.mrb[0].mxu0 %v1439
          %v1556 = vpop.f32.mrb[0].mxu0
          %v1557 = vadd.f32 0.0, %v1556
          %v1558 = vpop.f32.mrb[0].mxu0
          %v1559 = vpop.f32.mrb[0].mxu0
          %v1560 = vadd.f32 0.0, %v1559
          %v1561 = vpop.f32.mrb[0].mxu0
          %1562 = vmatprep.mubr.bf16.mxu0 0
          %1563 = vmatmul.mubr.bf16.gmra.mrb[0].mxu0 %v1440
          %v1564 = vpop.f32.mrb[0].mxu0
          %v1565 = vadd.f32 0.0, %v1564
          %v1566 = vpop.f32.mrb[0].mxu0
          %v1567 = vpop.f32.mrb[0].mxu0
          %v1568 = vadd.f32 0.0, %v1567
          %v1569 = vpop.f32.mrb[0].mxu0
          %1570 = vdwg.mxu0
          %v1571 = vadd.f32 %v1429, %v1541
          %v1572 = vadd.f32 %v1430, %v1544
          %v1573 = vadd.f32 %v1431, %v1549
          %v1574 = vadd.f32 %v1432, %v1552
          %v1575 = vadd.f32 %v1433, %v1557
          %v1576 = vadd.f32 %v1434, %v1560
          %v1577 = vadd.f32 %v1435, %v1565
          %v1578 = vadd.f32 %v1436, %v1568
          %v1579 = vmul.f32 %v1571, %v1571
          %v1580 = vmul.f32 %v1572, %v1572
          %v1581 = vmul.f32 %v1573, %v1573
          %v1582 = vmul.f32 %v1574, %v1574
          %v1583 = vmul.f32 %v1575, %v1575
          %v1584 = vmul.f32 %v1576, %v1576
          %v1585 = vmul.f32 %v1577, %v1577
          %v1586 = vmul.f32 %v1578, %v1578
          %v1587 = vpack.c.bf16 %v1580, %v1579
          %v1588 = vpack.c.bf16 %v1582, %v1581
          %v1589 = vpack.c.bf16 %v1584, %v1583
          %v1590 = vpack.c.bf16 %v1586, %v1585
          %v1591 = vld [vmem:[#allocation6] sm:$0xf]
          %v1592 = vld [vmem:[#allocation6 + $0x4] sm:$0xf]
          %v1593 = vld [vmem:[#allocation6 + $0x8] sm:$0xf]
          %v1594 = vld [vmem:[#allocation6 + $0xc] sm:$0xf]
          %v1595 = vld [vmem:[#allocation6 + $0x10] sm:$0xf]
          %v1596 = vld [vmem:[#allocation6 + $0x14] sm:$0xf]
          %v1597 = vld [vmem:[#allocation6 + $0x18] sm:$0xf]
          %v1598 = vld [vmem:[#allocation6 + $0x1c] sm:$0xf]
          %v1599 = vld [vmem:[#allocation6 + $0x20] sm:$0xf]
          %v1600 = vld [vmem:[#allocation6 + $0x24] sm:$0xf]
          %v1601 = vld [vmem:[#allocation6 + $0x28] sm:$0xf]
          %v1602 = vld [vmem:[#allocation6 + $0x2c] sm:$0xf]
          %v1603 = vld [vmem:[#allocation6 + $0x30] sm:$0xf]
          %v1604 = vld [vmem:[#allocation6 + $0x34] sm:$0xf]
          %v1605 = vld [vmem:[#allocation6 + $0x38] sm:$0xf]
          %v1606 = vld [vmem:[#allocation6 + $0x3c] sm:$0xf]
          %v1623 = vunpack.c.l.b16 %v1591
          %v1624 = vunpack.c.l.b16 %v1592
          %v1625 = vunpack.c.l.b16 %v1593
          %v1626 = vunpack.c.l.b16 %v1594
          %v1627 = vunpack.c.l.b16 %v1595
          %v1628 = vunpack.c.l.b16 %v1596
          %v1629 = vunpack.c.l.b16 %v1597
          %v1630 = vunpack.c.l.b16 %v1598
          %v1631 = vunpack.c.l.b16 %v1599
          %v1632 = vunpack.c.l.b16 %v1600
          %v1633 = vunpack.c.l.b16 %v1601
          %v1634 = vunpack.c.l.b16 %v1602
          %v1635 = vunpack.c.l.b16 %v1603
          %v1636 = vunpack.c.l.b16 %v1604
          %v1637 = vunpack.c.l.b16 %v1605
          %v1638 = vunpack.c.l.b16 %v1606
          %v1639 = vpack.c.b16 %v1624, %v1623
          %v1640 = vpack.c.b16 %v1626, %v1625
          %v1641 = vpack.c.b16 %v1628, %v1627
          %v1642 = vpack.c.b16 %v1630, %v1629
          %v1643 = vpack.c.b16 %v1632, %v1631
          %v1644 = vpack.c.b16 %v1634, %v1633
          %v1645 = vpack.c.b16 %v1636, %v1635
          %v1646 = vpack.c.b16 %v1638, %v1637
          %1655 = vmatprep.subr.bf16.mxu0 0
          %1656 = vmatpush1.bf16.msra.mxu0 %v1639
          %1657 = vmatprep.subr.bf16.mxu0 0
          %1658 = vmatpush1.bf16.msra.mxu0 %v1640
          %1659 = vmatprep.subr.bf16.mxu0 0
          %1660 = vmatpush1.bf16.msra.mxu0 %v1641
          %1661 = vmatprep.subr.bf16.mxu0 0
          %1662 = vmatpush1.bf16.msra.mxu0 %v1642
          %1663 = vmatprep.subr.bf16.mxu0 0
          %1664 = vmatpush1.bf16.msra.mxu0 %v1643
          %1665 = vmatprep.subr.bf16.mxu0 0
          %1666 = vmatpush1.bf16.msra.mxu0 %v1644
          %1667 = vmatprep.subr.bf16.mxu0 0
          %1668 = vmatpush1.bf16.msra.mxu0 %v1645
          %1669 = vmatprep.subr.bf16.mxu0 0
          %1670 = vmatpush1.bf16.msra.mxu0 %v1646
          %1671 = vmatprep.subr.bf16.mxu0 0
          %1672 = vmatpush1.bf16.msra.mxu0 0
          %1673 = vmatprep.subr.bf16.mxu0 0
          %1674 = vmatpush1.bf16.msra.mxu0 0
          %1675 = vmatprep.subr.bf16.mxu0 0
          %1676 = vmatpush1.bf16.msra.mxu0 0
          %1677 = vmatprep.subr.bf16.mxu0 0
          %1678 = vmatpush1.bf16.msra.mxu0 0
          %1679 = vmatprep.subr.bf16.mxu0 0
          %1680 = vmatpush1.bf16.msra.mxu0 0
          %1681 = vmatprep.subr.bf16.mxu0 0
          %1682 = vmatpush1.bf16.msra.mxu0 0
          %1683 = vmatprep.subr.bf16.mxu0 0
          %1684 = vmatpush1.bf16.msra.mxu0 0
          %1685 = vmatprep.subr.bf16.mxu0 0
          %1686 = vmatpush1.bf16.msra.mxu0 0
          %1687 = vmatprep.mubr.bf16.mxu0 0
          %1688 = vmatmul.mubr.bf16.gmra.mrb[0].mxu0 %v1587
          %v1689 = vpop.f32.mrb[0].mxu0
          %v1690 = vadd.f32 0.0, %v1689
          %v1691 = vpop.f32.mrb[0].mxu0
          %v1692 = vpop.f32.mrb[0].mxu0
          %v1693 = vadd.f32 0.0, %v1692
          %v1694 = vpop.f32.mrb[0].mxu0
          %1695 = vmatprep.mubr.bf16.mxu0 0
          %1696 = vmatmul.mubr.bf16.gmra.mrb[0].mxu0 %v1588
          %v1697 = vpop.f32.mrb[0].mxu0
          %v1698 = vadd.f32 0.0, %v1697
          %v1699 = vpop.f32.mrb[0].mxu0
          %v1700 = vpop.f32.mrb[0].mxu0
          %v1701 = vadd.f32 0.0, %v1700
          %v1702 = vpop.f32.mrb[0].mxu0
          %1703 = vmatprep.mubr.bf16.mxu0 0
          %1704 = vmatmul.mubr.bf16.gmra.mrb[0].mxu0 %v1589
          %v1705 = vpop.f32.mrb[0].mxu0
          %v1706 = vadd.f32 0.0, %v1705
          %v1707 = vpop.f32.mrb[0].mxu0
          %v1708 = vpop.f32.mrb[0].mxu0
          %v1709 = vadd.f32 0.0, %v1708
          %v1710 = vpop.f32.mrb[0].mxu0
          %1711 = vmatprep.mubr.bf16.mxu0 0
          %1712 = vmatmul.mubr.bf16.gmra.mrb[0].mxu0 %v1590
          %v1713 = vpop.f32.mrb[0].mxu0
          %v1714 = vadd.f32 0.0, %v1713
          %v1715 = vpop.f32.mrb[0].mxu0
          %v1716 = vpop.f32.mrb[0].mxu0
          %v1717 = vadd.f32 0.0, %v1716
          %v1718 = vpop.f32.mrb[0].mxu0
          %1719 = vdwg.mxu0
          %vm1720 = vcmp.gt.f32.partialorder %v1690, 0.0
          %vm1721 = vcmp.gt.f32.partialorder %v1693, 0.0
          %vm1722 = vcmp.gt.f32.partialorder %v1698, 0.0
          %vm1723 = vcmp.gt.f32.partialorder %v1701, 0.0
          %vm1724 = vcmp.gt.f32.partialorder %v1706, 0.0
          %vm1725 = vcmp.gt.f32.partialorder %v1709, 0.0
          %vm1726 = vcmp.gt.f32.partialorder %v1714, 0.0
          %vm1727 = vcmp.gt.f32.partialorder %v1717, 0.0
          %v1728 = vrsqrt.pop %v1690
          %v1729 = vrsqrt.pop %v1693
          %v1730 = vrsqrt.pop %v1698
          %v1731 = vrsqrt.pop %v1701
          %v1732 = vrsqrt.pop %v1706
          %v1733 = vrsqrt.pop %v1709
          %v1734 = vrsqrt.pop %v1714
          %v1735 = vrsqrt.pop %v1717
          %v1736 = vsel %vm1720, %v1728, 0.0
          %v1737 = vsel %vm1721, %v1729, 0.0
          %v1738 = vsel %vm1722, %v1730, 0.0
          %v1739 = vsel %vm1723, %v1731, 0.0
          %v1740 = vsel %vm1724, %v1732, 0.0
          %v1741 = vsel %vm1725, %v1733, 0.0
          %v1742 = vsel %vm1726, %v1734, 0.0
          %v1743 = vsel %vm1727, %v1735, 0.0
          %v1744 = vmul.f32 %v1571, %v1736
          %v1745 = vmul.f32 %v1572, %v1737
          %v1746 = vmul.f32 %v1573, %v1738
          %v1747 = vmul.f32 %v1574, %v1739
          %v1748 = vmul.f32 %v1575, %v1740
          %v1749 = vmul.f32 %v1576, %v1741
          %v1750 = vmul.f32 %v1577, %v1742
          %v1751 = vmul.f32 %v1578, %v1743
          %1752 = vst [vmem:[%s328] sm:$0xff] %v1744
          %1753 = vst [vmem:[%s328 + $0x8] sm:$0xff] %v1745
          %1754 = vst [vmem:[%s328 + $0x10] sm:$0xff] %v1746
          %1755 = vst [vmem:[%s328 + $0x18] sm:$0xff] %v1747
          %1756 = vst [vmem:[%s328 + $0x20] sm:$0xff] %v1748
          %1757 = vst [vmem:[%s328 + $0x28] sm:$0xff] %v1749
          %1758 = vst [vmem:[%s328 + $0x30] sm:$0xff] %v1750
          %1759 = vst [vmem:[%s328 + $0x38] sm:$0xff] %v1751
        $region64: #{tpu_custom_call.1} parent=47 // pred_fallthru
          _
        %s1760 = sand.u32 %s199, 1
        %s1761 = scalar_lea.sflag [#allocation5], %s1760
        %s1762 = sand.u32 %s199, 1
        %s1763 = smul.addr %s1762, 64
        %s1764 = scalar_lea.vmem [#allocation8], %s1763
        // Predicated region
        $region65: #{tpu_custom_call.1} parent=47 // pred_check
          %p1765 = pneg %p209
        $region66: #{tpu_custom_call.1} parent=47 // pred_check_branch
          %1767 = sbr.rel (%p1765) target = $region68
        $region67: #{tpu_custom_call.1} parent=47 // pred_region
          %s1769 = ssub.s32 1024, 1024
          %1770 = vsyncadd %s1761, %s1769
          %s1771 = smul.addr %s29, 8
          %s1772 = smul.addr %s1771, 128
          %s1773 = scalar_lea.hbm %s7, %s1772
          %s1774 = sshll.u32 %s1764, 4
          %s1775 = int_to_ptr.vmem [resolvable:$true] %s1774
          %1780 = dma.vmem_to_hbm [thread:$0]  %s1775, 1024, %s1773, %s1761, 128, 128, 8
        $region68: #{tpu_custom_call.1} parent=47 // pred_fallthru
          _
      $region48: #{tpu_custom_call.1} parent=5 // pred_fallthru
        _
      %p1781 = scmp.le.s32.totalorder 2, %s20
      // Predicated region
      $region69: #{tpu_custom_call.1} parent=5 // pred_check
        %p1782 = pneg %p1781
      $region70: #{tpu_custom_call.1} parent=5 // pred_check_branch
        %1784 = sbr.rel (%p1782) target = $region72
      $region71: #{tpu_custom_call.1} parent=5 // pred_region
        %s1785 = ssub.s32 %s20, 2
        // Predicated region
        $region73: #{tpu_custom_call.1} parent=71 // pred_check
          %p1786 = pneg %p215
        $region74: #{tpu_custom_call.1} parent=71 // pred_check_branch
          %1788 = sbr.rel (%p1786) target = $region76
        $region75: #{tpu_custom_call.1} parent=71 // pred_region
          %s1789 = sand.u32 %s200, 1
          %s1790 = scalar_lea.sflag [#allocation5], %s1789
          %s1791 = sand.u32 %s200, 1
          %s1792 = smul.addr %s1791, 64
          %s1793 = scalar_lea.vmem [#allocation8], %s1792
          %1794 = dma.done %s1790, 1024
        $region76: #{tpu_custom_call.1} parent=71 // pred_fallthru
          _
      $region72: #{tpu_custom_call.1} parent=5 // pred_fallthru
        _
    $region6: #{tpu_custom_call.1} parent=1 // loop_footer
      %s24 = sadd.s32 1, %s20
    $region7: #{tpu_custom_call.1} parent=1 // loop_footer_branch
      %19 = sbr.rel target = $region3
    $region8: #{tpu_custom_call.1} parent=1 // loop_exit
      _
    %1795 = vsyncpa [#allocation4], 1
    %s1796 = scalar_lea.sflag [#allocation4], 1
    %1797 = vsyncpa %s1796, 1
    %1798 = vsyncpa [#allocation7], 1
    %1799 = vsyncpa [#allocation5], 1
    %s1800 = scalar_lea.sflag [#allocation5], 1
    %1801 = vsyncpa %s1800, 1

</llo_original>
